<compile_context>
chip_gen: v7x
topology: tpu7x:2x2x1
jax: 0.10.0
libtpu: 0.0.40
codegen_flags: <defaults>
</compile_context>

<pallas_src>
import functools

import jax
import jax.numpy as jnp
from jax.experimental import pallas as pl
from jax.experimental.pallas import tpu as pltpu

_BN_EPS = 1e-5
_NEG_BIG = -1e30
_LANES = 128


# ---------------------------------------------------------------------------
# The fused whole-network kernel (one grid step == TB samples).
# ---------------------------------------------------------------------------
def _resnet_kernel(x_ref, ws_ref, w1a_ref, w2a_ref, wda_ref,
                   w1b_ref, w2b_ref, wdb_ref, wf1_ref, wf2_ref, b_ref,
                   o_ref, *, tb, l2):
    c1 = wda_ref.shape[0] // 2          # 16
    c2 = wdb_ref.shape[1]               # 32
    bias = b_ref[...]                   # (9, 128) f32, all biases packed

    # Rows are time-major (row = t2*tb + s), so a one-timestep shift is a
    # TB-row shift; the zero block IS the conv padding (no cross-sample leak).
    def shift_prev(v):                  # out[r] = v[r - tb], zeros for t2 == 0
        return jnp.concatenate(
            [jnp.zeros((tb, v.shape[1]), v.dtype), v[:-tb, :]], axis=0)

    def shift_next(v):                  # out[r] = v[r + tb], zeros for t2 == last
        return jnp.concatenate(
            [v[tb:, :], jnp.zeros((tb, v.shape[1]), v.dtype)], axis=0)

    def mm_bf16(u, w_ref):              # one bf16 cast per conv, f32 accumulation
        return jnp.dot(u.astype(jnp.bfloat16), w_ref[...],
                       preferred_element_type=jnp.float32)

    def mm_f32(u, w_ref):
        return jnp.dot(u, w_ref[...], preferred_element_type=jnp.float32)

    # ---- stem: Conv1d(1 -> 16, k=3, pad=1) + ReLU, paired (even|odd) layout.
    x = x_ref[0]                                                     # (R, 2) f32
    u = jnp.concatenate([shift_prev(x[:, 1:2]), x, shift_next(x[:, 0:1])], axis=1)
    h = jnp.maximum(mm_f32(u, ws_ref) + bias[0:1, :2 * c1], 0.0)     # (R, 32)

    # ---- res_block1: 16 -> 16, stride 1 (stays in paired layout).
    def paired_unroll(p, cin):          # taps [in(2t-1) | in(2t) | in(2t+1) | in(2t+2)]
        return jnp.concatenate(
            [shift_prev(p[:, cin:2 * cin]), p, shift_next(p[:, 0:cin])], axis=1)

    out = jnp.maximum(mm_bf16(paired_unroll(h, c1), w1a_ref) + bias[1:2, :2 * c1], 0.0)
    out = mm_bf16(paired_unroll(out, c1), w2a_ref) + bias[2:3, :2 * c1]
    ident = mm_f32(h, wda_ref) + bias[3:4, :2 * c1]      # (1 - alpha) folded in
    h = jnp.maximum(out + ident, 0.0)                    # (R, 32), paired 16ch

    # ---- res_block2: 16 -> 32, stride 2 (drops to window//2 resolution).
    u = jnp.concatenate([shift_prev(h[:, c1:2 * c1]), h], axis=1)    # taps [2t-1,2t,2t+1]
    g = jnp.maximum(mm_bf16(u, w1b_ref) + bias[4:5, :c2], 0.0)       # (R, 32)
    u = jnp.concatenate([shift_prev(g), g, shift_next(g)], axis=1)   # (R, 96)
    out = mm_bf16(u, w2b_ref) + bias[5:6, :c2]
    ident = mm_f32(h[:, 0:c1], wdb_ref) + bias[6:7, :c2]             # even rows = stride 2
    h = jnp.maximum(out + ident, 0.0)                                # (R, 32)

    # ---- head: flatten (time-major row blocks -> lanes) + fc1 + relu + fc2 + softmax.
    flat = jnp.concatenate([h[l * tb:(l + 1) * tb, :] for l in range(l2)], axis=1)
    nh = wf1_ref.shape[1]
    z = jnp.maximum(mm_f32(flat, wf1_ref) + bias[7:8, :nh], 0.0)     # (TB, 128)
    logits = mm_f32(z, wf2_ref) + bias[8:9, :]                       # padded classes -> -1e30
    m = jnp.max(logits, axis=-1, keepdims=True)
    e = jnp.exp(logits - m)
    o_ref[0] = (e / jnp.sum(e, axis=-1, keepdims=True)).astype(o_ref.dtype)


# ---------------------------------------------------------------------------
# Host-side weight preparation (run ONCE per checkpoint, outside the forward).
# ---------------------------------------------------------------------------
def prepare_params(params):
    f32, bf16 = jnp.float32, jnp.bfloat16

    def fold(w, b, gamma, beta, extra=None):
        scale = gamma / jnp.sqrt(1.0 + _BN_EPS)          # eval-mode running stats 0/1
        shift = beta
        if extra is not None:
            scale = scale * extra
            shift = shift * extra
        return (w.astype(f32) * scale[:, None, None],
                b.astype(f32) * scale + shift)

    def taps(w):                                          # (Cout,Cin,K) -> (K,Cin,Cout)
        return jnp.transpose(w.astype(f32), (2, 1, 0))

    def paired_w(w):                                      # stride-1 K=3, paired in/out
        t = taps(w)
        z = jnp.zeros_like(t[0])
        return jnp.concatenate(
            [jnp.concatenate([t[0], t[1], t[2], z], axis=0),
             jnp.concatenate([z, t[0], t[1], t[2]], axis=0)], axis=1)

    def stacked_w(w):                                     # K=3 taps stacked on K dim
        t = taps(w)
        return jnp.concatenate([t[0], t[1], t[2]], axis=0)

    def blockdiag(wd):
        z = jnp.zeros_like(wd)
        return jnp.concatenate([jnp.concatenate([wd, z], axis=1),
                                jnp.concatenate([z, wd], axis=1)], axis=0)

    def pad_lanes(v):
        return jnp.pad(v.astype(f32), (0, _LANES - v.shape[0]))

    out, biases = {}, []

    # stem (no BN)
    out["ws"] = paired_w(params["conv1_w"])                               # (4, 32) f32
    b0 = params["conv1_b"].astype(f32)
    biases.append(pad_lanes(jnp.concatenate([b0, b0])))

    # res_block1 (16 -> 16, stride 1)
    rp = params["rb1"]
    w1, b1 = fold(rp["w1"], rp["b1"], rp["bn1_gamma"], rp["bn1_beta"])
    w2, b2 = fold(rp["w2"], rp["b2"], rp["bn2_gamma"], rp["bn2_beta"])
    wd, bd = fold(rp["wd"], rp["bd"], rp["bnd_gamma"], rp["bnd_beta"],
                  extra=1.0 - rp["alpha"])
    out["w1a"] = paired_w(w1).astype(bf16)                                # (64, 32)
    out["w2a"] = paired_w(w2).astype(bf16)                                # (64, 32)
    out["wda"] = blockdiag(taps(wd)[0])                                   # (32, 32) f32
    biases += [pad_lanes(jnp.concatenate([b1, b1])),
               pad_lanes(jnp.concatenate([b2, b2])),
               pad_lanes(jnp.concatenate([bd, bd]))]

    # res_block2 (16 -> 32, stride 2)
    rp = params["rb2"]
    w1, b1 = fold(rp["w1"], rp["b1"], rp["bn1_gamma"], rp["bn1_beta"])
    w2, b2 = fold(rp["w2"], rp["b2"], rp["bn2_gamma"], rp["bn2_beta"])
    wd, bd = fold(rp["wd"], rp["bd"], rp["bnd_gamma"], rp["bnd_beta"],
                  extra=1.0 - rp["alpha"])
    out["w1b"] = stacked_w(w1).astype(bf16)                               # (48, 32)
    out["w2b"] = stacked_w(w2).astype(bf16)                               # (96, 32)
    out["wdb"] = taps(wd)[0]                                              # (16, 32) f32
    biases += [pad_lanes(b1), pad_lanes(b2), pad_lanes(bd)]

    # head: channel-major flatten baked into fc1; fc2 padded to 128 lanes.
    nh, feat = params["fc1_w"].shape
    c2 = out["wdb"].shape[1]
    l2 = feat // c2
    wf1 = jnp.transpose(params["fc1_w"].reshape(nh, c2, l2).astype(f32), (2, 1, 0))
    out["wf1"] = wf1.reshape(l2 * c2, nh)                                 # (256, 128) f32
    biases.append(pad_lanes(params["fc1_b"]))

    nc = params["fc2_w"].shape[0]
    out["wf2"] = jnp.zeros((nh, _LANES), f32).at[:, :nc].set(
        params["fc2_w"].T.astype(f32))                                    # (128, 128) f32
    biases.append(jnp.full((_LANES,), _NEG_BIG, f32).at[:nc].set(
        params["fc2_b"].astype(f32)))

    out["biases"] = jnp.stack(biases)                                     # (9, 128) f32
    return out


# ---------------------------------------------------------------------------
# Forward wrapper.
# ---------------------------------------------------------------------------
def _round_up(x, m):
    return (x + m - 1) // m * m


def _pick_batch_tile(batch):
    """Multiple of 8, capped (VMEM / v7x), >=2 grid steps when batch allows."""
    b8 = _round_up(batch, 8)
    if b8 <= 256:
        return b8 if batch < 16 else _round_up((batch + 1) // 2, 8)
    steps = -(-b8 // 256)
    return _round_up(-(-batch // steps), 8)


@functools.partial(jax.jit, static_argnums=(2,))
def resnet_forward(x_ncl, folded, num_classes):
    """x_ncl: (B, 1, window) f32 -> (B, num_classes) softmax probabilities."""
    B, _, L = x_ncl.shape
    l2 = L // 2
    tb = _pick_batch_tile(B)
    grid = -(-B // tb)
    bp = grid * tb
    r = l2 * tb

    # time-major paired input: tile g, row (t2*tb + s') = [x[s, 2*t2], x[s, 2*t2+1]]
    x = x_ncl[:, 0, :].astype(jnp.float32).reshape(B, l2, 2)
    x = jnp.pad(x, ((0, bp - B), (0, 0), (0, 0)))
    x = x.reshape(grid, tb, l2, 2).transpose(0, 2, 1, 3).reshape(grid, r, 2)

    names = ("ws", "w1a", "w2a", "wda", "w1b", "w2b", "wdb", "wf1", "wf2", "biases")
    weights = [folded[k] for k in names]

    def const_spec(a):
        return pl.BlockSpec(a.shape, lambda g: (0, 0))    # fetched once, reused

    out = pl.pallas_call(
        functools.partial(_resnet_kernel, tb=tb, l2=l2),
        out_shape=jax.ShapeDtypeStruct((grid, tb, _LANES), jnp.float32),
        grid=(grid,),
        in_specs=[pl.BlockSpec((1, r, 2), lambda g: (g, 0, 0))]
                + [const_spec(a) for a in weights],
        out_specs=pl.BlockSpec((1, tb, _LANES), lambda g: (g, 0, 0)),
        compiler_params=pltpu.CompilerParams(
            dimension_semantics=("parallel",)),
    )(x, *weights)
    return out.reshape(bp, _LANES)[:B, :num_classes]


# ---------------------------------------------------------------------------
# Pure-JAX reference (mirrors the PyTorch module, eval-mode BN) for checking.
# ---------------------------------------------------------------------------
def reference_forward(x_ncl, params):
    def conv1d(x, w, b, stride, pad):
        y = jax.lax.conv_general_dilated(
            x, w, window_strides=(stride,), padding=[(pad, pad)],
            dimension_numbers=("NCH", "OIH", "NCH"))
        return y + b[None, :, None]

    def bn(x, gamma, beta):
        return x / jnp.sqrt(1.0 + _BN_EPS) * gamma[None, :, None] + beta[None, :, None]

    def resblock(x, rp, stride):
        out = jax.nn.relu(bn(conv1d(x, rp["w1"], rp["b1"], stride, 1),
                             rp["bn1_gamma"], rp["bn1_beta"]))
        out = bn(conv1d(out, rp["w2"], rp["b2"], 1, 1),
                 rp["bn2_gamma"], rp["bn2_beta"])
        ident = bn(conv1d(x, rp["wd"], rp["bd"], stride, 0),
                   rp["bnd_gamma"], rp["bnd_beta"])
        out = out - rp["alpha"] * ident
        out = out + ident
        return jax.nn.relu(out)

    h = jax.nn.relu(conv1d(x_ncl, params["conv1_w"], params["conv1_b"], 1, 1))
    h = resblock(h, params["rb1"], 1)
    h = resblock(h, params["rb2"], 2)
    flat = h.reshape(h.shape[0], -1)
    z = jax.nn.relu(flat @ params["fc1_w"].T + params["fc1_b"])
    logits = z @ params["fc2_w"].T + params["fc2_b"]
    return jax.nn.softmax(logits, axis=1)


# ---------------------------------------------------------------------------
# Deterministic parameter init (shapes from the PyTorch module __init__).
# ---------------------------------------------------------------------------
def init_params(key, num_classes, window_size):
    keys = iter(jax.random.split(key, 40))

    def rnd(shape, scale=0.1):
        return jax.random.normal(next(keys), shape, jnp.float32) * scale

    def resblock_params(cin, cout):
        return {
            "w1": rnd((cout, cin, 3)), "b1": rnd((cout,)),
            "bn1_gamma": 1.0 + rnd((cout,), 0.05), "bn1_beta": rnd((cout,), 0.05),
            "w2": rnd((cout, cout, 3)), "b2": rnd((cout,)),
            "bn2_gamma": 1.0 + rnd((cout,), 0.05), "bn2_beta": rnd((cout,), 0.05),
            "wd": rnd((cout, cin, 1)), "bd": rnd((cout,)),
            "bnd_gamma": 1.0 + rnd((cout,), 0.05), "bnd_beta": rnd((cout,), 0.05),
            "alpha": jnp.full((1,), 0.01, jnp.float32),
        }

    return {
        "conv1_w": rnd((16, 1, 3)), "conv1_b": rnd((16,)),
        "rb1": resblock_params(16, 16),
        "rb2": resblock_params(16, 32),
        "fc1_w": rnd((128, 32 * (window_size // 2))), "fc1_b": rnd((128,)),
        "fc2_w": rnd((num_classes, 128)), "fc2_b": rnd((num_classes,)),
    }


if __name__ == "__main__":
    num_classes, window_size, batch = 5, 16, 6

    key = jax.random.PRNGKey(0)
    pkey, xkey = jax.random.split(key)
    params = init_params(pkey, num_classes, window_size)
    x = jax.random.normal(xkey, (batch, 1, window_size), jnp.float32)

    folded = jax.block_until_ready(prepare_params(params))   # one-time fold
    out = resnet_forward(x, folded, num_classes)
    out = jax.block_until_ready(out)
    ref = reference_forward(x, params)

    assert out.shape == (batch, num_classes), out.shape
    assert bool(jnp.all(jnp.isfinite(out)))
    assert bool(jnp.allclose(jnp.sum(out, axis=1), 1.0, atol=1e-5))
    max_err = float(jnp.max(jnp.abs(out - ref)))
    assert max_err < 3e-2, max_err  # bf16 conv matmuls, f32 accumulation/epilogues
    print("KERNEL_OK")
</pallas_src>

<mosaic_0001>
module attributes {stable_mosaic.version = 11 : i64} {
  func.func @_resnet_kernel(%arg0: i32, %arg1: memref<1x64x2xf32, #tpu.memory_space<vmem>>, %arg2: memref<4x32xf32, #tpu.memory_space<vmem>>, %arg3: memref<64x32xbf16, #tpu.memory_space<vmem>>, %arg4: memref<64x32xbf16, #tpu.memory_space<vmem>>, %arg5: memref<32x32xf32, #tpu.memory_space<vmem>>, %arg6: memref<48x32xbf16, #tpu.memory_space<vmem>>, %arg7: memref<96x32xbf16, #tpu.memory_space<vmem>>, %arg8: memref<16x32xf32, #tpu.memory_space<vmem>>, %arg9: memref<256x128xf32, #tpu.memory_space<vmem>>, %arg10: memref<128x128xf32, #tpu.memory_space<vmem>>, %arg11: memref<9x128xf32, #tpu.memory_space<vmem>>, %arg12: memref<1x8x128xf32, #tpu.memory_space<vmem>>) attributes {dimension_semantics = [#tpu.dimension_semantics<parallel>], iteration_bounds = array<i64: 1>, scalar_prefetch = 0 : i64, scratch_operands = 0 : i64, tpu.core_type = #tpu.core_type<tc>, window_params = [{transform_indices = @transform_0, window_bounds = array<i64: 1, 64, 2>}, {pipeline_mode = #tpu.pipeline_mode<synchronous>, transform_indices = @transform_1, window_bounds = array<i64: 4, 32>}, {pipeline_mode = #tpu.pipeline_mode<synchronous>, transform_indices = @transform_2, window_bounds = array<i64: 64, 32>}, {pipeline_mode = #tpu.pipeline_mode<synchronous>, transform_indices = @transform_3, window_bounds = array<i64: 64, 32>}, {pipeline_mode = #tpu.pipeline_mode<synchronous>, transform_indices = @transform_4, window_bounds = array<i64: 32, 32>}, {pipeline_mode = #tpu.pipeline_mode<synchronous>, transform_indices = @transform_5, window_bounds = array<i64: 48, 32>}, {pipeline_mode = #tpu.pipeline_mode<synchronous>, transform_indices = @transform_6, window_bounds = array<i64: 96, 32>}, {pipeline_mode = #tpu.pipeline_mode<synchronous>, transform_indices = @transform_7, window_bounds = array<i64: 16, 32>}, {pipeline_mode = #tpu.pipeline_mode<synchronous>, transform_indices = @transform_8, window_bounds = array<i64: 256, 128>}, {pipeline_mode = #tpu.pipeline_mode<synchronous>, transform_indices = @transform_9, window_bounds = array<i64: 128, 128>}, {pipeline_mode = #tpu.pipeline_mode<synchronous>, transform_indices = @transform_10, window_bounds = array<i64: 9, 128>}, {transform_indices = @transform_11, window_bounds = array<i64: 1, 8, 128>}]} {
    %c0 = arith.constant 0 : index
    %c0_0 = arith.constant 0 : index
    %0 = vector.load %arg11[%c0, %c0_0] : memref<9x128xf32, #tpu.memory_space<vmem>>, vector<9x128xf32>
    %c0_1 = arith.constant 0 : index
    %c0_2 = arith.constant 0 : index
    %c0_3 = arith.constant 0 : index
    %1 = vector.load %arg1[%c0_1, %c0_2, %c0_3] : memref<1x64x2xf32, #tpu.memory_space<vmem>>, vector<1x64x2xf32>
    %2 = vector.shape_cast %1 : vector<1x64x2xf32> to vector<64x2xf32>
    %3 = vector.extract_strided_slice %2 {offsets = [0, 1], sizes = [64, 1], strides = [1, 1]} : vector<64x2xf32> to vector<64x1xf32>
    %cst = arith.constant 0.000000e+00 : f32
    %4 = vector.broadcast %cst : f32 to vector<8x1xf32>
    %5 = vector.extract_strided_slice %3 {offsets = [0, 0], sizes = [56, 1], strides = [1, 1]} : vector<64x1xf32> to vector<56x1xf32>
    %6 = tpu.concatenate %4, %5 in 0 : vector<8x1xf32>, vector<56x1xf32> -> vector<64x1xf32>
    %7 = vector.extract_strided_slice %2 {offsets = [0, 0], sizes = [64, 1], strides = [1, 1]} : vector<64x2xf32> to vector<64x1xf32>
    %8 = vector.extract_strided_slice %7 {offsets = [8, 0], sizes = [56, 1], strides = [1, 1]} : vector<64x1xf32> to vector<56x1xf32>
    %cst_4 = arith.constant 0.000000e+00 : f32
    %9 = vector.broadcast %cst_4 : f32 to vector<8x1xf32>
    %10 = tpu.concatenate %8, %9 in 0 : vector<56x1xf32>, vector<8x1xf32> -> vector<64x1xf32>
    %11 = tpu.concatenate %6, %2, %10 in 1 : vector<64x1xf32>, vector<64x2xf32>, vector<64x1xf32> -> vector<64x4xf32>
    %c0_5 = arith.constant 0 : index
    %c0_6 = arith.constant 0 : index
    %12 = vector.load %arg2[%c0_5, %c0_6] : memref<4x32xf32, #tpu.memory_space<vmem>>, vector<4x32xf32>
    %cst_7 = arith.constant dense<0.000000e+00> : vector<64x32xf32>
    %13 = tpu.matmul %11, %12, %cst_7 {dimension_numbers = #tpu.dot_dimension_numbers<[1], [0], [0], [1], [0, 0, 1, 1], [], []>} : vector<64x4xf32>, vector<4x32xf32>, vector<64x32xf32> -> vector<64x32xf32>
    %14 = vector.extract_strided_slice %0 {offsets = [0, 0], sizes = [1, 32], strides = [1, 1]} : vector<9x128xf32> to vector<1x32xf32>
    %15 = vector.broadcast %14 : vector<1x32xf32> to vector<64x32xf32>
    %16 = arith.addf %13, %15 : vector<64x32xf32>
    %cst_8 = arith.constant 0.000000e+00 : f32
    %17 = vector.broadcast %cst_8 : f32 to vector<64x32xf32>
    %18 = arith.maximumf %16, %17 : vector<64x32xf32>
    %19 = vector.extract_strided_slice %18 {offsets = [0, 16], sizes = [64, 16], strides = [1, 1]} : vector<64x32xf32> to vector<64x16xf32>
    %cst_9 = arith.constant 0.000000e+00 : f32
    %20 = vector.broadcast %cst_9 : f32 to vector<8x16xf32>
    %21 = vector.extract_strided_slice %19 {offsets = [0, 0], sizes = [56, 16], strides = [1, 1]} : vector<64x16xf32> to vector<56x16xf32>
    %22 = tpu.concatenate %20, %21 in 0 : vector<8x16xf32>, vector<56x16xf32> -> vector<64x16xf32>
    %23 = vector.extract_strided_slice %18 {offsets = [0, 0], sizes = [64, 16], strides = [1, 1]} : vector<64x32xf32> to vector<64x16xf32>
    %24 = vector.extract_strided_slice %23 {offsets = [8, 0], sizes = [56, 16], strides = [1, 1]} : vector<64x16xf32> to vector<56x16xf32>
    %cst_10 = arith.constant 0.000000e+00 : f32
    %25 = vector.broadcast %cst_10 : f32 to vector<8x16xf32>
    %26 = tpu.concatenate %24, %25 in 0 : vector<56x16xf32>, vector<8x16xf32> -> vector<64x16xf32>
    %27 = tpu.concatenate %22, %18, %26 in 1 : vector<64x16xf32>, vector<64x32xf32>, vector<64x16xf32> -> vector<64x64xf32>
    %28 = arith.truncf %27 : vector<64x64xf32> to vector<64x64xbf16>
    %c0_11 = arith.constant 0 : index
    %c0_12 = arith.constant 0 : index
    %29 = vector.load %arg3[%c0_11, %c0_12] : memref<64x32xbf16, #tpu.memory_space<vmem>>, vector<64x32xbf16>
    %cst_13 = arith.constant dense<0.000000e+00> : vector<64x32xf32>
    %30 = tpu.matmul %28, %29, %cst_13 {dimension_numbers = #tpu.dot_dimension_numbers<[1], [0], [0], [1], [0, 0, 1, 1], [], []>} : vector<64x64xbf16>, vector<64x32xbf16>, vector<64x32xf32> -> vector<64x32xf32>
    %31 = vector.extract_strided_slice %0 {offsets = [1, 0], sizes = [1, 32], strides = [1, 1]} : vector<9x128xf32> to vector<1x32xf32>
    %32 = vector.broadcast %31 : vector<1x32xf32> to vector<64x32xf32>
    %33 = arith.addf %30, %32 : vector<64x32xf32>
    %cst_14 = arith.constant 0.000000e+00 : f32
    %34 = vector.broadcast %cst_14 : f32 to vector<64x32xf32>
    %35 = arith.maximumf %33, %34 : vector<64x32xf32>
    %36 = vector.extract_strided_slice %35 {offsets = [0, 16], sizes = [64, 16], strides = [1, 1]} : vector<64x32xf32> to vector<64x16xf32>
    %cst_15 = arith.constant 0.000000e+00 : f32
    %37 = vector.broadcast %cst_15 : f32 to vector<8x16xf32>
    %38 = vector.extract_strided_slice %36 {offsets = [0, 0], sizes = [56, 16], strides = [1, 1]} : vector<64x16xf32> to vector<56x16xf32>
    %39 = tpu.concatenate %37, %38 in 0 : vector<8x16xf32>, vector<56x16xf32> -> vector<64x16xf32>
    %40 = vector.extract_strided_slice %35 {offsets = [0, 0], sizes = [64, 16], strides = [1, 1]} : vector<64x32xf32> to vector<64x16xf32>
    %41 = vector.extract_strided_slice %40 {offsets = [8, 0], sizes = [56, 16], strides = [1, 1]} : vector<64x16xf32> to vector<56x16xf32>
    %cst_16 = arith.constant 0.000000e+00 : f32
    %42 = vector.broadcast %cst_16 : f32 to vector<8x16xf32>
    %43 = tpu.concatenate %41, %42 in 0 : vector<56x16xf32>, vector<8x16xf32> -> vector<64x16xf32>
    %44 = tpu.concatenate %39, %35, %43 in 1 : vector<64x16xf32>, vector<64x32xf32>, vector<64x16xf32> -> vector<64x64xf32>
    %45 = arith.truncf %44 : vector<64x64xf32> to vector<64x64xbf16>
    %c0_17 = arith.constant 0 : index
    %c0_18 = arith.constant 0 : index
    %46 = vector.load %arg4[%c0_17, %c0_18] : memref<64x32xbf16, #tpu.memory_space<vmem>>, vector<64x32xbf16>
    %cst_19 = arith.constant dense<0.000000e+00> : vector<64x32xf32>
    %47 = tpu.matmul %45, %46, %cst_19 {dimension_numbers = #tpu.dot_dimension_numbers<[1], [0], [0], [1], [0, 0, 1, 1], [], []>} : vector<64x64xbf16>, vector<64x32xbf16>, vector<64x32xf32> -> vector<64x32xf32>
    %48 = vector.extract_strided_slice %0 {offsets = [2, 0], sizes = [1, 32], strides = [1, 1]} : vector<9x128xf32> to vector<1x32xf32>
    %49 = vector.broadcast %48 : vector<1x32xf32> to vector<64x32xf32>
    %50 = arith.addf %47, %49 : vector<64x32xf32>
    %c0_20 = arith.constant 0 : index
    %c0_21 = arith.constant 0 : index
    %51 = vector.load %arg5[%c0_20, %c0_21] : memref<32x32xf32, #tpu.memory_space<vmem>>, vector<32x32xf32>
    %cst_22 = arith.constant dense<0.000000e+00> : vector<64x32xf32>
    %52 = tpu.matmul %18, %51, %cst_22 {dimension_numbers = #tpu.dot_dimension_numbers<[1], [0], [0], [1], [0, 0, 1, 1], [], []>} : vector<64x32xf32>, vector<32x32xf32>, vector<64x32xf32> -> vector<64x32xf32>
    %53 = vector.extract_strided_slice %0 {offsets = [3, 0], sizes = [1, 32], strides = [1, 1]} : vector<9x128xf32> to vector<1x32xf32>
    %54 = vector.broadcast %53 : vector<1x32xf32> to vector<64x32xf32>
    %55 = arith.addf %52, %54 : vector<64x32xf32>
    %56 = arith.addf %50, %55 : vector<64x32xf32>
    %cst_23 = arith.constant 0.000000e+00 : f32
    %57 = vector.broadcast %cst_23 : f32 to vector<64x32xf32>
    %58 = arith.maximumf %56, %57 : vector<64x32xf32>
    %59 = vector.extract_strided_slice %58 {offsets = [0, 16], sizes = [64, 16], strides = [1, 1]} : vector<64x32xf32> to vector<64x16xf32>
    %cst_24 = arith.constant 0.000000e+00 : f32
    %60 = vector.broadcast %cst_24 : f32 to vector<8x16xf32>
    %61 = vector.extract_strided_slice %59 {offsets = [0, 0], sizes = [56, 16], strides = [1, 1]} : vector<64x16xf32> to vector<56x16xf32>
    %62 = tpu.concatenate %60, %61 in 0 : vector<8x16xf32>, vector<56x16xf32> -> vector<64x16xf32>
    %63 = tpu.concatenate %62, %58 in 1 : vector<64x16xf32>, vector<64x32xf32> -> vector<64x48xf32>
    %64 = arith.truncf %63 : vector<64x48xf32> to vector<64x48xbf16>
    %c0_25 = arith.constant 0 : index
    %c0_26 = arith.constant 0 : index
    %65 = vector.load %arg6[%c0_25, %c0_26] : memref<48x32xbf16, #tpu.memory_space<vmem>>, vector<48x32xbf16>
    %cst_27 = arith.constant dense<0.000000e+00> : vector<64x32xf32>
    %66 = tpu.matmul %64, %65, %cst_27 {dimension_numbers = #tpu.dot_dimension_numbers<[1], [0], [0], [1], [0, 0, 1, 1], [], []>} : vector<64x48xbf16>, vector<48x32xbf16>, vector<64x32xf32> -> vector<64x32xf32>
    %67 = vector.extract_strided_slice %0 {offsets = [4, 0], sizes = [1, 32], strides = [1, 1]} : vector<9x128xf32> to vector<1x32xf32>
    %68 = vector.broadcast %67 : vector<1x32xf32> to vector<64x32xf32>
    %69 = arith.addf %66, %68 : vector<64x32xf32>
    %cst_28 = arith.constant 0.000000e+00 : f32
    %70 = vector.broadcast %cst_28 : f32 to vector<64x32xf32>
    %71 = arith.maximumf %69, %70 : vector<64x32xf32>
    %cst_29 = arith.constant 0.000000e+00 : f32
    %72 = vector.broadcast %cst_29 : f32 to vector<8x32xf32>
    %73 = vector.extract_strided_slice %71 {offsets = [0, 0], sizes = [56, 32], strides = [1, 1]} : vector<64x32xf32> to vector<56x32xf32>
    %74 = tpu.concatenate %72, %73 in 0 : vector<8x32xf32>, vector<56x32xf32> -> vector<64x32xf32>
    %75 = vector.extract_strided_slice %71 {offsets = [8, 0], sizes = [56, 32], strides = [1, 1]} : vector<64x32xf32> to vector<56x32xf32>
    %cst_30 = arith.constant 0.000000e+00 : f32
    %76 = vector.broadcast %cst_30 : f32 to vector<8x32xf32>
    %77 = tpu.concatenate %75, %76 in 0 : vector<56x32xf32>, vector<8x32xf32> -> vector<64x32xf32>
    %78 = tpu.concatenate %74, %71, %77 in 1 : vector<64x32xf32>, vector<64x32xf32>, vector<64x32xf32> -> vector<64x96xf32>
    %79 = arith.truncf %78 : vector<64x96xf32> to vector<64x96xbf16>
    %c0_31 = arith.constant 0 : index
    %c0_32 = arith.constant 0 : index
    %80 = vector.load %arg7[%c0_31, %c0_32] : memref<96x32xbf16, #tpu.memory_space<vmem>>, vector<96x32xbf16>
    %cst_33 = arith.constant dense<0.000000e+00> : vector<64x32xf32>
    %81 = tpu.matmul %79, %80, %cst_33 {dimension_numbers = #tpu.dot_dimension_numbers<[1], [0], [0], [1], [0, 0, 1, 1], [], []>} : vector<64x96xbf16>, vector<96x32xbf16>, vector<64x32xf32> -> vector<64x32xf32>
    %82 = vector.extract_strided_slice %0 {offsets = [5, 0], sizes = [1, 32], strides = [1, 1]} : vector<9x128xf32> to vector<1x32xf32>
    %83 = vector.broadcast %82 : vector<1x32xf32> to vector<64x32xf32>
    %84 = arith.addf %81, %83 : vector<64x32xf32>
    %85 = vector.extract_strided_slice %58 {offsets = [0, 0], sizes = [64, 16], strides = [1, 1]} : vector<64x32xf32> to vector<64x16xf32>
    %c0_34 = arith.constant 0 : index
    %c0_35 = arith.constant 0 : index
    %86 = vector.load %arg8[%c0_34, %c0_35] : memref<16x32xf32, #tpu.memory_space<vmem>>, vector<16x32xf32>
    %cst_36 = arith.constant dense<0.000000e+00> : vector<64x32xf32>
    %87 = tpu.matmul %85, %86, %cst_36 {dimension_numbers = #tpu.dot_dimension_numbers<[1], [0], [0], [1], [0, 0, 1, 1], [], []>} : vector<64x16xf32>, vector<16x32xf32>, vector<64x32xf32> -> vector<64x32xf32>
    %88 = vector.extract_strided_slice %0 {offsets = [6, 0], sizes = [1, 32], strides = [1, 1]} : vector<9x128xf32> to vector<1x32xf32>
    %89 = vector.broadcast %88 : vector<1x32xf32> to vector<64x32xf32>
    %90 = arith.addf %87, %89 : vector<64x32xf32>
    %91 = arith.addf %84, %90 : vector<64x32xf32>
    %cst_37 = arith.constant 0.000000e+00 : f32
    %92 = vector.broadcast %cst_37 : f32 to vector<64x32xf32>
    %93 = arith.maximumf %91, %92 : vector<64x32xf32>
    %94 = vector.extract_strided_slice %93 {offsets = [0, 0], sizes = [8, 32], strides = [1, 1]} : vector<64x32xf32> to vector<8x32xf32>
    %95 = vector.extract_strided_slice %93 {offsets = [8, 0], sizes = [8, 32], strides = [1, 1]} : vector<64x32xf32> to vector<8x32xf32>
    %96 = vector.extract_strided_slice %93 {offsets = [16, 0], sizes = [8, 32], strides = [1, 1]} : vector<64x32xf32> to vector<8x32xf32>
    %97 = vector.extract_strided_slice %93 {offsets = [24, 0], sizes = [8, 32], strides = [1, 1]} : vector<64x32xf32> to vector<8x32xf32>
    %98 = vector.extract_strided_slice %93 {offsets = [32, 0], sizes = [8, 32], strides = [1, 1]} : vector<64x32xf32> to vector<8x32xf32>
    %99 = vector.extract_strided_slice %93 {offsets = [40, 0], sizes = [8, 32], strides = [1, 1]} : vector<64x32xf32> to vector<8x32xf32>
    %100 = vector.extract_strided_slice %93 {offsets = [48, 0], sizes = [8, 32], strides = [1, 1]} : vector<64x32xf32> to vector<8x32xf32>
    %101 = vector.extract_strided_slice %93 {offsets = [56, 0], sizes = [8, 32], strides = [1, 1]} : vector<64x32xf32> to vector<8x32xf32>
    %102 = tpu.concatenate %94, %95, %96, %97, %98, %99, %100, %101 in 1 : vector<8x32xf32>, vector<8x32xf32>, vector<8x32xf32>, vector<8x32xf32>, vector<8x32xf32>, vector<8x32xf32>, vector<8x32xf32>, vector<8x32xf32> -> vector<8x256xf32>
    %c0_38 = arith.constant 0 : index
    %c0_39 = arith.constant 0 : index
    %103 = vector.load %arg9[%c0_38, %c0_39] : memref<256x128xf32, #tpu.memory_space<vmem>>, vector<256x128xf32>
    %cst_40 = arith.constant dense<0.000000e+00> : vector<8x128xf32>
    %104 = tpu.matmul %102, %103, %cst_40 {dimension_numbers = #tpu.dot_dimension_numbers<[1], [0], [0], [1], [0, 0, 1, 1], [], []>} : vector<8x256xf32>, vector<256x128xf32>, vector<8x128xf32> -> vector<8x128xf32>
    %105 = vector.extract_strided_slice %0 {offsets = [7, 0], sizes = [1, 128], strides = [1, 1]} : vector<9x128xf32> to vector<1x128xf32>
    %106 = vector.broadcast %105 : vector<1x128xf32> to vector<8x128xf32>
    %107 = arith.addf %104, %106 : vector<8x128xf32>
    %cst_41 = arith.constant 0.000000e+00 : f32
    %108 = vector.broadcast %cst_41 : f32 to vector<8x128xf32>
    %109 = arith.maximumf %107, %108 : vector<8x128xf32>
    %c0_42 = arith.constant 0 : index
    %c0_43 = arith.constant 0 : index
    %110 = vector.load %arg10[%c0_42, %c0_43] : memref<128x128xf32, #tpu.memory_space<vmem>>, vector<128x128xf32>
    %cst_44 = arith.constant dense<0.000000e+00> : vector<8x128xf32>
    %111 = tpu.matmul %109, %110, %cst_44 {dimension_numbers = #tpu.dot_dimension_numbers<[1], [0], [0], [1], [0, 0, 1, 1], [], []>} : vector<8x128xf32>, vector<128x128xf32>, vector<8x128xf32> -> vector<8x128xf32>
    %112 = vector.extract_strided_slice %0 {offsets = [8, 0], sizes = [1, 128], strides = [1, 1]} : vector<9x128xf32> to vector<1x128xf32>
    %113 = vector.broadcast %112 : vector<1x128xf32> to vector<8x128xf32>
    %114 = arith.addf %111, %113 : vector<8x128xf32>
    %cst_45 = arith.constant dense<0xFF800000> : vector<8xf32>
    %115 = vector.multi_reduction <maximumf>, %114, %cst_45 [1] : vector<8x128xf32> to vector<8xf32>
    %116 = vector.shape_cast %115 : vector<8xf32> to vector<8x1xf32>
    %117 = vector.broadcast %116 : vector<8x1xf32> to vector<8x128xf32>
    %118 = arith.subf %114, %117 : vector<8x128xf32>
    %119 = math.exp %118 : vector<8x128xf32>
    %cst_46 = arith.constant dense<0.000000e+00> : vector<8xf32>
    %120 = vector.multi_reduction <add>, %119, %cst_46 [1] : vector<8x128xf32> to vector<8xf32>
    %121 = vector.shape_cast %120 : vector<8xf32> to vector<8x1xf32>
    %122 = vector.broadcast %121 : vector<8x1xf32> to vector<8x128xf32>
    %123 = arith.divf %119, %122 : vector<8x128xf32>
    %c0_47 = arith.constant 0 : index
    %c0_48 = arith.constant 0 : index
    %c0_49 = arith.constant 0 : index
    %124 = vector.load %arg12[%c0_47, %c0_48, %c0_49] : memref<1x8x128xf32, #tpu.memory_space<vmem>>, vector<1x8x128xf32>
    %125 = vector.shape_cast %124 : vector<1x8x128xf32> to vector<8x128xf32>
    %126 = vector.shape_cast %123 : vector<8x128xf32> to vector<1x8x128xf32>
    tpu.vector_store %arg12[%c0_47, %c0_48, %c0_49], %126 {strides = array<i32>} : memref<1x8x128xf32, #tpu.memory_space<vmem>>, vector<1x8x128xf32>,
    return
  }
  func.func @transform_0(%arg0: i32) -> (i32, i32, i32) {
    %c0_i32 = arith.constant 0 : i32
    %c0_i32_0 = arith.constant 0 : i32
    %c0_i32_1 = arith.constant 0 : i32
    return %arg0, %c0_i32, %c0_i32_0 : i32, i32, i32
  }
  func.func @transform_1(%arg0: i32) -> (i32, i32) {
    %c0_i32 = arith.constant 0 : i32
    %c0_i32_0 = arith.constant 0 : i32
    %c0_i32_1 = arith.constant 0 : i32
    return %c0_i32, %c0_i32_0 : i32, i32
  }
  func.func @transform_2(%arg0: i32) -> (i32, i32) {
    %c0_i32 = arith.constant 0 : i32
    %c0_i32_0 = arith.constant 0 : i32
    %c0_i32_1 = arith.constant 0 : i32
    return %c0_i32, %c0_i32_0 : i32, i32
  }
  func.func @transform_3(%arg0: i32) -> (i32, i32) {
    %c0_i32 = arith.constant 0 : i32
    %c0_i32_0 = arith.constant 0 : i32
    %c0_i32_1 = arith.constant 0 : i32
    return %c0_i32, %c0_i32_0 : i32, i32
  }
  func.func @transform_4(%arg0: i32) -> (i32, i32) {
    %c0_i32 = arith.constant 0 : i32
    %c0_i32_0 = arith.constant 0 : i32
    %c0_i32_1 = arith.constant 0 : i32
    return %c0_i32, %c0_i32_0 : i32, i32
  }
  func.func @transform_5(%arg0: i32) -> (i32, i32) {
    %c0_i32 = arith.constant 0 : i32
    %c0_i32_0 = arith.constant 0 : i32
    %c0_i32_1 = arith.constant 0 : i32
    return %c0_i32, %c0_i32_0 : i32, i32
  }
  func.func @transform_6(%arg0: i32) -> (i32, i32) {
    %c0_i32 = arith.constant 0 : i32
    %c0_i32_0 = arith.constant 0 : i32
    %c0_i32_1 = arith.constant 0 : i32
    return %c0_i32, %c0_i32_0 : i32, i32
  }
  func.func @transform_7(%arg0: i32) -> (i32, i32) {
    %c0_i32 = arith.constant 0 : i32
    %c0_i32_0 = arith.constant 0 : i32
    %c0_i32_1 = arith.constant 0 : i32
    return %c0_i32, %c0_i32_0 : i32, i32
  }
  func.func @transform_8(%arg0: i32) -> (i32, i32) {
    %c0_i32 = arith.constant 0 : i32
    %c0_i32_0 = arith.constant 0 : i32
    %c0_i32_1 = arith.constant 0 : i32
    return %c0_i32, %c0_i32_0 : i32, i32
  }
  func.func @transform_9(%arg0: i32) -> (i32, i32) {
    %c0_i32 = arith.constant 0 : i32
    %c0_i32_0 = arith.constant 0 : i32
    %c0_i32_1 = arith.constant 0 : i32
    return %c0_i32, %c0_i32_0 : i32, i32
  }
  func.func @transform_10(%arg0: i32) -> (i32, i32) {
    %c0_i32 = arith.constant 0 : i32
    %c0_i32_0 = arith.constant 0 : i32
    %c0_i32_1 = arith.constant 0 : i32
    return %c0_i32, %c0_i32_0 : i32, i32
  }
  func.func @transform_11(%arg0: i32) -> (i32, i32, i32) {
    %c0_i32 = arith.constant 0 : i32
    %c0_i32_0 = arith.constant 0 : i32
    %c0_i32_1 = arith.constant 0 : i32
    return %arg0, %c0_i32, %c0_i32_0 : i32, i32, i32
  }
}

</mosaic_0001>

<llo_original>
// kernel: resnet_forward.1
$region0: #{resnet_forward.1}
  #allocation0 [shape = 'u32[]', space=smem, size = 0x4, offset = 0x4, fixed_abs, tag = 'smem constant byte address 0x4 - core index']
  #allocation1 [shape = 'u32[144,128]{1,0:T(1,128)}', space=vmem, size = 0x12000, scoped, tag = 'internal scratch']
  %s0 = inlined_call_operand.vmem [shape: f32[1,64,2], index: 0, kind: input, shape index: {}]
  %s1 = inlined_call_operand.vmem [shape: f32[4,32], index: 1, kind: input, shape index: {}]
  %s2 = inlined_call_operand.vmem [shape: bf16[64,32], index: 2, kind: input, shape index: {}]
  %s3 = inlined_call_operand.vmem [shape: bf16[64,32], index: 3, kind: input, shape index: {}]
  %s4 = inlined_call_operand.hbm [shape: f32[32,32], index: 4, kind: input, shape index: {}]
  %s5 = inlined_call_operand.vmem [shape: bf16[48,32], index: 5, kind: input, shape index: {}]
  %s6 = inlined_call_operand.vmem [shape: bf16[96,32], index: 6, kind: input, shape index: {}]
  %s7 = inlined_call_operand.hbm [shape: f32[16,32], index: 7, kind: input, shape index: {}]
  %s8 = inlined_call_operand.vmem [shape: f32[256,128], index: 8, kind: input, shape index: {}]
  %s9 = inlined_call_operand.vmem [shape: f32[128,128], index: 9, kind: input, shape index: {}]
  %s10 = inlined_call_operand.hbm [shape: f32[9,128], index: 10, kind: input, shape index: {}]
  %s11 = inlined_call_operand.hbm [shape: f32[1,8,128], index: 11, kind: output, shape index: {}]
  %s12 = sld [smem:[#allocation0]]
  $region66: #{resnet_forward.1} parent=0
    _
  %s14 = ssub.s32 1, %s12
  %s15 = scalar_select 0, %s14, %s12
  $region1: #{resnet_forward.1} parent=0
    #allocation2 [shape = 'u8[16384]{0}', space=vmem, size = 0x4000, scoped, tag = 'input window, operand 4, single buffered']
    #allocation3 [shape = 's32[1]{0}', space=sflag, size = 0x4, scoped, tag = 'scoped memory for resnet_forward.1']
    #allocation4 [shape = 's32[1]{0}', space=sflag, size = 0x4, scoped, tag = 'scoped memory for resnet_forward.1']
    #allocation5 [shape = 'u8[8192]{0}', space=vmem, size = 0x2000, scoped, tag = 'input window, operand 7, single buffered']
    #allocation6 [shape = 's32[1]{0}', space=sflag, size = 0x4, scoped, tag = 'scoped memory for resnet_forward.1']
    #allocation7 [shape = 'u8[8192]{0}', space=vmem, size = 0x2000, scoped, tag = 'input window, operand 10, single buffered']
    #allocation8 [shape = 'u8[4096]{0}', space=vmem, size = 0x1000, scoped, tag = 'output window, operand 0, single buffered']
    %16 = vsyncpa [#allocation3], 0
    %17 = vsyncpa [#allocation6], 0
    %18 = vsyncpa [#allocation4], 0
    // Predicated region
    $region2: #{resnet_forward.1} parent=1 // pred_check
      _
    $region3: #{resnet_forward.1} parent=1 // pred_check_branch
      %20 = sbr.rel (0) target = $region5
    $region4: #{resnet_forward.1} parent=1 // pred_region
      _
    $region5: #{resnet_forward.1} parent=1 // pred_fallthru
      _
    // Predicated region
    $region6: #{resnet_forward.1} parent=1 // pred_check
      _
    $region7: #{resnet_forward.1} parent=1 // pred_check_branch
      %22 = sbr.rel (0) target = $region9
    $region8: #{resnet_forward.1} parent=1 // pred_region
      _
    $region9: #{resnet_forward.1} parent=1 // pred_fallthru
      _
    // Predicated region
    $region10: #{resnet_forward.1} parent=1 // pred_check
      _
    $region11: #{resnet_forward.1} parent=1 // pred_check_branch
      %24 = sbr.rel (0) target = $region13
    $region12: #{resnet_forward.1} parent=1 // pred_region
      _
    $region13: #{resnet_forward.1} parent=1 // pred_fallthru
      _
    // Predicated region
    $region14: #{resnet_forward.1} parent=1 // pred_check
      _
    $region15: #{resnet_forward.1} parent=1 // pred_check_branch
      %26 = sbr.rel (0) target = $region17
    $region16: #{resnet_forward.1} parent=1 // pred_region
      _
    $region17: #{resnet_forward.1} parent=1 // pred_fallthru
      _
    // Predicated region
    $region18: #{resnet_forward.1} parent=1 // pred_check
      _
    $region19: #{resnet_forward.1} parent=1 // pred_check_branch
      %28 = sbr.rel (0) target = $region21
    $region20: #{resnet_forward.1} parent=1 // pred_region
      %s30 = ssub.s32 512, 512
      %31 = vsyncadd [#allocation3], %s30
      %s32 = sshll.u32 [#allocation2], 4
      %s33 = int_to_ptr.vmem [resolvable:$true] %s32
      %38 = dma.hbm_to_vmem [thread:$0]  %s4, 512, %s33, [#allocation3], 128, 128, 8
    $region21: #{resnet_forward.1} parent=1 // pred_fallthru
      _
    // Predicated region
    $region22: #{resnet_forward.1} parent=1 // pred_check
      _
    $region23: #{resnet_forward.1} parent=1 // pred_check_branch
      %40 = sbr.rel (0) target = $region25
    $region24: #{resnet_forward.1} parent=1 // pred_region
      _
    $region25: #{resnet_forward.1} parent=1 // pred_fallthru
      _
    // Predicated region
    $region26: #{resnet_forward.1} parent=1 // pred_check
      _
    $region27: #{resnet_forward.1} parent=1 // pred_check_branch
      %42 = sbr.rel (0) target = $region29
    $region28: #{resnet_forward.1} parent=1 // pred_region
      _
    $region29: #{resnet_forward.1} parent=1 // pred_fallthru
      _
    // Predicated region
    $region30: #{resnet_forward.1} parent=1 // pred_check
      _
    $region31: #{resnet_forward.1} parent=1 // pred_check_branch
      %44 = sbr.rel (0) target = $region33
    $region32: #{resnet_forward.1} parent=1 // pred_region
      %s46 = ssub.s32 256, 256
      %47 = vsyncadd [#allocation6], %s46
      %s48 = sshll.u32 [#allocation5], 4
      %s49 = int_to_ptr.vmem [resolvable:$true] %s48
      %54 = dma.hbm_to_vmem [thread:$0]  %s7, 256, %s49, [#allocation6], 128, 128, 8
    $region33: #{resnet_forward.1} parent=1 // pred_fallthru
      _
    // Predicated region
    $region34: #{resnet_forward.1} parent=1 // pred_check
      _
    $region35: #{resnet_forward.1} parent=1 // pred_check_branch
      %56 = sbr.rel (0) target = $region37
    $region36: #{resnet_forward.1} parent=1 // pred_region
      _
    $region37: #{resnet_forward.1} parent=1 // pred_fallthru
      _
    // Predicated region
    $region38: #{resnet_forward.1} parent=1 // pred_check
      _
    $region39: #{resnet_forward.1} parent=1 // pred_check_branch
      %58 = sbr.rel (0) target = $region41
    $region40: #{resnet_forward.1} parent=1 // pred_region
      _
    $region41: #{resnet_forward.1} parent=1 // pred_fallthru
      _
    // Predicated region
    $region42: #{resnet_forward.1} parent=1 // pred_check
      _
    $region43: #{resnet_forward.1} parent=1 // pred_check_branch
      %60 = sbr.rel (0) target = $region45
    $region44: #{resnet_forward.1} parent=1 // pred_region
      %s62 = ssub.s32 256, 256
      %63 = vsyncadd [#allocation6], %s62
      %s64 = sshll.u32 [#allocation7], 4
      %s65 = int_to_ptr.vmem [resolvable:$true] %s64
      %70 = dma.hbm_to_vmem [thread:$0]  %s10, 256, %s65, [#allocation6], 128, 128, 8
    $region45: #{resnet_forward.1} parent=1 // pred_fallthru
      _
    // Predicated region
    $region46: #{resnet_forward.1} parent=1 // pred_check
      _
    $region47: #{resnet_forward.1} parent=1 // pred_check_branch
      %72 = sbr.rel (0) target = $region49
    $region48: #{resnet_forward.1} parent=1 // pred_region
      %73 = dma.done [#allocation3], 512
    $region49: #{resnet_forward.1} parent=1 // pred_fallthru
      _
    // Predicated region
    $region50: #{resnet_forward.1} parent=1 // pred_check
      _
    $region51: #{resnet_forward.1} parent=1 // pred_check_branch
      %75 = sbr.rel (0) target = $region53
    $region52: #{resnet_forward.1} parent=1 // pred_region
      %76 = dma.done [#allocation6], 256
    $region53: #{resnet_forward.1} parent=1 // pred_fallthru
      _
    // Predicated region
    $region54: #{resnet_forward.1} parent=1 // pred_check
      _
    $region55: #{resnet_forward.1} parent=1 // pred_check_branch
      %78 = sbr.rel (0) target = $region57
    $region56: #{resnet_forward.1} parent=1 // pred_region
      %79 = dma.done [#allocation6], 256
    $region57: #{resnet_forward.1} parent=1 // pred_fallthru
      _
    %v81 = vld [vmem:[#allocation7] sm:$0xff]
    %v82 = vld [vmem:[#allocation7 + $0x8] sm:$0x1]
    %v83 = vld [vmem:[%s0] sm:$0xff]
    %v84 = vld [vmem:[%s0 + $0x8] sm:$0xff]
    %v85 = vld [vmem:[%s0 + $0x10] sm:$0xff]
    %v86 = vld [vmem:[%s0 + $0x18] sm:$0xff]
    %v87 = vld [vmem:[%s0 + $0x20] sm:$0xff]
    %v88 = vld [vmem:[%s0 + $0x28] sm:$0xff]
    %v89 = vld [vmem:[%s0 + $0x30] sm:$0xff]
    %v90 = vld [vmem:[%s0 + $0x38] sm:$0xff]
    %98 = vrot.lane.b32.xlu0 %v83, 127
    %v99 = vpop.permute.xlu0 %98
    %100 = vrot.lane.b32.xlu0 %v84, 127
    %v101 = vpop.permute.xlu0 %100
    %102 = vrot.lane.b32.xlu0 %v85, 127
    %v103 = vpop.permute.xlu0 %102
    %104 = vrot.lane.b32.xlu0 %v86, 127
    %v105 = vpop.permute.xlu0 %104
    %106 = vrot.lane.b32.xlu0 %v87, 127
    %v107 = vpop.permute.xlu0 %106
    %108 = vrot.lane.b32.xlu0 %v88, 127
    %v109 = vpop.permute.xlu0 %108
    %110 = vrot.lane.b32.xlu0 %v89, 127
    %v111 = vpop.permute.xlu0 %110
    %120 = vrot.lane.b32.xlu0 %v83, 1
    %v121 = vpop.permute.xlu0 %120
    %122 = vrot.lane.b32.xlu0 %v84, 1
    %v123 = vpop.permute.xlu0 %122
    %124 = vrot.lane.b32.xlu0 %v85, 1
    %v125 = vpop.permute.xlu0 %124
    %126 = vrot.lane.b32.xlu0 %v86, 1
    %v127 = vpop.permute.xlu0 %126
    %128 = vrot.lane.b32.xlu0 %v87, 1
    %v129 = vpop.permute.xlu0 %128
    %130 = vrot.lane.b32.xlu0 %v88, 1
    %v131 = vpop.permute.xlu0 %130
    %132 = vrot.lane.b32.xlu0 %v89, 1
    %v133 = vpop.permute.xlu0 %132
    %134 = vrot.lane.b32.xlu0 %v90, 1
    %v135 = vpop.permute.xlu0 %134
    %145 = vrot.lane.b32.xlu0 %v84, 3
    %v146 = vpop.permute.xlu0 %145
    %147 = vrot.lane.b32.xlu0 %v85, 3
    %v148 = vpop.permute.xlu0 %147
    %149 = vrot.lane.b32.xlu0 %v86, 3
    %v150 = vpop.permute.xlu0 %149
    %151 = vrot.lane.b32.xlu0 %v87, 3
    %v152 = vpop.permute.xlu0 %151
    %153 = vrot.lane.b32.xlu0 %v88, 3
    %v154 = vpop.permute.xlu0 %153
    %155 = vrot.lane.b32.xlu0 %v89, 3
    %v156 = vpop.permute.xlu0 %155
    %157 = vrot.lane.b32.xlu0 %v90, 3
    %v158 = vpop.permute.xlu0 %157
    %159 = vrot.lane.b32.xlu0 0.0, 3
    %v160 = vpop.permute.xlu0 %159
    %vm169 = vcmask 7168
    %v170 = vsel %vm169, 0.0, %v121
    %v171 = vsel %vm169, %v99, %v123
    %v172 = vsel %vm169, %v101, %v125
    %v173 = vsel %vm169, %v103, %v127
    %v174 = vsel %vm169, %v105, %v129
    %v175 = vsel %vm169, %v107, %v131
    %v176 = vsel %vm169, %v109, %v133
    %v177 = vsel %vm169, %v111, %v135
    %vm178 = vcmask 23552
    %v179 = vsel %vm178, %v170, %v146
    %v180 = vsel %vm178, %v171, %v148
    %v181 = vsel %vm178, %v172, %v150
    %v182 = vsel %vm178, %v173, %v152
    %v183 = vsel %vm178, %v174, %v154
    %v184 = vsel %vm178, %v175, %v156
    %v185 = vsel %vm178, %v176, %v158
    %v186 = vsel %vm178, %v177, %v160
    %v187 = vld [vmem:[%s1] sm:$0xf]
    %v188 = vlaneseq
    %v189 = vshrl.u32 %v188, 7
    %v190 = vsub.s32 0, %v189
    %v191 = vrot.slane %v81, %v190
    %vm192 = vcmask 31744
    %v194 = vsel %vm192, %v179, 0
    %v197 = vsel %vm192, %v180, 0
    %v200 = vsel %vm192, %v181, 0
    %v203 = vsel %vm192, %v182, 0
    %v206 = vsel %vm192, %v183, 0
    %v209 = vsel %vm192, %v184, 0
    %v212 = vsel %vm192, %v185, 0
    %v215 = vsel %vm192, %v186, 0
    %vm217 = vcmask 1043456
    %v219 = vsel %vm217, %v187, 0
    %221 = vmatprep.subr.mxu0 0.0
    %222 = vmatpush1.msra.mxu0 %v219
    %223 = vmatprep.subr.mxu0 0.0
    %224 = vmatpush1.msra.mxu0 0.0
    %225 = vmatprep.subr.mxu0 0.0
    %226 = vmatpush1.msra.mxu0 0.0
    %227 = vmatprep.subr.mxu0 0.0
    %228 = vmatpush1.msra.mxu0 0.0
    %229 = vmatprep.subr.mxu0 0.0
    %230 = vmatpush1.msra.mxu0 0.0
    %231 = vmatprep.subr.mxu0 0.0
    %232 = vmatpush1.msra.mxu0 0.0
    %233 = vmatprep.subr.mxu0 0.0
    %234 = vmatpush1.msra.mxu0 0.0
    %235 = vmatprep.subr.mxu0 0.0
    %236 = vmatpush1.msra.mxu0 0.0
    %237 = vmatprep.subr.mxu0 0.0
    %238 = vmatpush1.msra.mxu0 0.0
    %239 = vmatprep.subr.mxu0 0.0
    %240 = vmatpush1.msra.mxu0 0.0
    %241 = vmatprep.subr.mxu0 0.0
    %242 = vmatpush1.msra.mxu0 0.0
    %243 = vmatprep.subr.mxu0 0.0
    %244 = vmatpush1.msra.mxu0 0.0
    %245 = vmatprep.subr.mxu0 0.0
    %246 = vmatpush1.msra.mxu0 0.0
    %247 = vmatprep.subr.mxu0 0.0
    %248 = vmatpush1.msra.mxu0 0.0
    %249 = vmatprep.subr.mxu0 0.0
    %250 = vmatpush1.msra.mxu0 0.0
    %251 = vmatprep.subr.mxu0 0.0
    %252 = vmatpush1.msra.mxu0 0.0
    %253 = vmatprep.subr.mxu0 0.0
    %254 = vmatpush1.msra.mxu0 0.0
    %255 = vmatprep.subr.mxu0 0.0
    %256 = vmatpush1.msra.mxu0 0.0
    %257 = vmatprep.subr.mxu0 0.0
    %258 = vmatpush1.msra.mxu0 0.0
    %259 = vmatprep.subr.mxu0 0.0
    %260 = vmatpush1.msra.mxu0 0.0
    %261 = vmatprep.subr.mxu0 0.0
    %262 = vmatpush1.msra.mxu0 0.0
    %263 = vmatprep.subr.mxu0 0.0
    %264 = vmatpush1.msra.mxu0 0.0
    %265 = vmatprep.subr.mxu0 0.0
    %266 = vmatpush1.msra.mxu0 0.0
    %267 = vmatprep.subr.mxu0 0.0
    %268 = vmatpush1.msra.mxu0 0.0
    %269 = vmatprep.subr.mxu0 0.0
    %270 = vmatpush1.msra.mxu0 0.0
    %271 = vmatprep.subr.mxu0 0.0
    %272 = vmatpush1.msra.mxu0 0.0
    %273 = vmatprep.subr.mxu0 0.0
    %274 = vmatpush1.msra.mxu0 0.0
    %275 = vmatprep.subr.mxu0 0.0
    %276 = vmatpush1.msra.mxu0 0.0
    %277 = vmatprep.subr.mxu0 0.0
    %278 = vmatpush1.msra.mxu0 0.0
    %279 = vmatprep.subr.mxu0 0.0
    %280 = vmatpush1.msra.mxu0 0.0
    %281 = vmatprep.subr.mxu0 0.0
    %282 = vmatpush1.msra.mxu0 0.0
    %283 = vmatprep.subr.mxu0 0.0
    %284 = vmatpush1.msra.mxu0 0.0
    %285 = vmatprep.mubr.f32.mxu0 0.0
    %286 = vmatmul.mubr.f32.gmra.mrb[0].mxu0 %v194
    %v287 = vpop.f32.mrb[0].mxu0
    %v288 = vadd.f32 %v191, %v287
    %v289 = vpop.f32.mrb[0].mxu0
    %290 = vmatprep.mubr.f32.mxu0 0.0
    %291 = vmatmul.mubr.f32.gmra.mrb[0].mxu0 %v197
    %v292 = vpop.f32.mrb[0].mxu0
    %v293 = vadd.f32 %v191, %v292
    %v294 = vpop.f32.mrb[0].mxu0
    %295 = vmatprep.mubr.f32.mxu0 0.0
    %296 = vmatmul.mubr.f32.gmra.mrb[0].mxu0 %v200
    %v297 = vpop.f32.mrb[0].mxu0
    %v298 = vadd.f32 %v191, %v297
    %v299 = vpop.f32.mrb[0].mxu0
    %300 = vmatprep.mubr.f32.mxu0 0.0
    %301 = vmatmul.mubr.f32.gmra.mrb[0].mxu0 %v203
    %v302 = vpop.f32.mrb[0].mxu0
    %v303 = vadd.f32 %v191, %v302
    %v304 = vpop.f32.mrb[0].mxu0
    %305 = vmatprep.mubr.f32.mxu0 0.0
    %306 = vmatmul.mubr.f32.gmra.mrb[0].mxu0 %v206
    %v307 = vpop.f32.mrb[0].mxu0
    %v308 = vadd.f32 %v191, %v307
    %v309 = vpop.f32.mrb[0].mxu0
    %310 = vmatprep.mubr.f32.mxu0 0.0
    %311 = vmatmul.mubr.f32.gmra.mrb[0].mxu0 %v209
    %v312 = vpop.f32.mrb[0].mxu0
    %v313 = vadd.f32 %v191, %v312
    %v314 = vpop.f32.mrb[0].mxu0
    %315 = vmatprep.mubr.f32.mxu0 0.0
    %316 = vmatmul.mubr.f32.gmra.mrb[0].mxu0 %v212
    %v317 = vpop.f32.mrb[0].mxu0
    %v318 = vadd.f32 %v191, %v317
    %v319 = vpop.f32.mrb[0].mxu0
    %320 = vmatprep.mubr.f32.mxu0 0.0
    %321 = vmatmul.mubr.f32.gmra.mrb[0].mxu0 %v215
    %v322 = vpop.f32.mrb[0].mxu0
    %v323 = vadd.f32 %v191, %v322
    %v324 = vpop.f32.mrb[0].mxu0
    %325 = vdwg.mxu0
    %v326 = vmax.f32 %v288, 0.0
    %v327 = vmax.f32 %v293, 0.0
    %v328 = vmax.f32 %v298, 0.0
    %v329 = vmax.f32 %v303, 0.0
    %v330 = vmax.f32 %v308, 0.0
    %v331 = vmax.f32 %v313, 0.0
    %v332 = vmax.f32 %v318, 0.0
    %v333 = vmax.f32 %v323, 0.0
    %341 = vrot.lane.b32.xlu0 %v326, 112
    %v342 = vpop.permute.xlu0 %341
    %343 = vrot.lane.b32.xlu0 %v327, 112
    %v344 = vpop.permute.xlu0 %343
    %345 = vrot.lane.b32.xlu0 %v328, 112
    %v346 = vpop.permute.xlu0 %345
    %347 = vrot.lane.b32.xlu0 %v329, 112
    %v348 = vpop.permute.xlu0 %347
    %349 = vrot.lane.b32.xlu0 %v330, 112
    %v350 = vpop.permute.xlu0 %349
    %351 = vrot.lane.b32.xlu0 %v331, 112
    %v352 = vpop.permute.xlu0 %351
    %353 = vrot.lane.b32.xlu0 %v332, 112
    %v354 = vpop.permute.xlu0 %353
    %363 = vrot.lane.b32.xlu0 %v326, 16
    %v364 = vpop.permute.xlu0 %363
    %365 = vrot.lane.b32.xlu0 %v327, 16
    %v366 = vpop.permute.xlu0 %365
    %367 = vrot.lane.b32.xlu0 %v328, 16
    %v368 = vpop.permute.xlu0 %367
    %369 = vrot.lane.b32.xlu0 %v329, 16
    %v370 = vpop.permute.xlu0 %369
    %371 = vrot.lane.b32.xlu0 %v330, 16
    %v372 = vpop.permute.xlu0 %371
    %373 = vrot.lane.b32.xlu0 %v331, 16
    %v374 = vpop.permute.xlu0 %373
    %375 = vrot.lane.b32.xlu0 %v332, 16
    %v376 = vpop.permute.xlu0 %375
    %377 = vrot.lane.b32.xlu0 %v333, 16
    %v378 = vpop.permute.xlu0 %377
    %387 = vrot.lane.b32.xlu0 %v327, 48
    %v388 = vpop.permute.xlu0 %387
    %389 = vrot.lane.b32.xlu0 %v328, 48
    %v390 = vpop.permute.xlu0 %389
    %391 = vrot.lane.b32.xlu0 %v329, 48
    %v392 = vpop.permute.xlu0 %391
    %393 = vrot.lane.b32.xlu0 %v330, 48
    %v394 = vpop.permute.xlu0 %393
    %395 = vrot.lane.b32.xlu0 %v331, 48
    %v396 = vpop.permute.xlu0 %395
    %397 = vrot.lane.b32.xlu0 %v332, 48
    %v398 = vpop.permute.xlu0 %397
    %399 = vrot.lane.b32.xlu0 %v333, 48
    %v400 = vpop.permute.xlu0 %399
    %401 = vrot.lane.b32.xlu0 0.0, 48
    %v402 = vpop.permute.xlu0 %401
    %vm411 = vcmask 130048
    %v412 = vsel %vm411, 0.0, %v364
    %v413 = vsel %vm411, %v342, %v366
    %v414 = vsel %vm411, %v344, %v368
    %v415 = vsel %vm411, %v346, %v370
    %v416 = vsel %vm411, %v348, %v372
    %v417 = vsel %vm411, %v350, %v374
    %v418 = vsel %vm411, %v352, %v376
    %v419 = vsel %vm411, %v354, %v378
    %vm420 = vcmask 392192
    %v421 = vsel %vm420, %v412, %v388
    %v422 = vsel %vm420, %v413, %v390
    %v423 = vsel %vm420, %v414, %v392
    %v424 = vsel %vm420, %v415, %v394
    %v425 = vsel %vm420, %v416, %v396
    %v426 = vsel %vm420, %v417, %v398
    %v427 = vsel %vm420, %v418, %v400
    %v428 = vsel %vm420, %v419, %v402
    %v429 = vpack.c.bf16 %v422, %v421
    %v430 = vpack.c.bf16 %v424, %v423
    %v431 = vpack.c.bf16 %v426, %v425
    %v432 = vpack.c.bf16 %v428, %v427
    %v433 = vld [vmem:[%s2] sm:$0xf]
    %v434 = vld [vmem:[%s2 + $0x4] sm:$0xf]
    %v435 = vld [vmem:[%s2 + $0x8] sm:$0xf]
    %v436 = vld [vmem:[%s2 + $0xc] sm:$0xf]
    %v437 = vld [vmem:[%s2 + $0x10] sm:$0xf]
    %v438 = vld [vmem:[%s2 + $0x14] sm:$0xf]
    %v439 = vld [vmem:[%s2 + $0x18] sm:$0xf]
    %v440 = vld [vmem:[%s2 + $0x1c] sm:$0xf]
    %v441 = vlaneseq
    %v442 = vshrl.u32 %v441, 7
    %v443 = vsub.s32 1, %v442
    %v444 = vrot.slane %v81, %v443
    %v453 = vunpack.c.l.b16 %v433
    %v454 = vunpack.c.l.b16 %v434
    %v455 = vunpack.c.l.b16 %v435
    %v456 = vunpack.c.l.b16 %v436
    %v457 = vunpack.c.l.b16 %v437
    %v458 = vunpack.c.l.b16 %v438
    %v459 = vunpack.c.l.b16 %v439
    %v460 = vunpack.c.l.b16 %v440
    %v461 = vpack.c.b16 %v454, %v453
    %v462 = vpack.c.b16 %v456, %v455
    %v463 = vpack.c.b16 %v458, %v457
    %v464 = vpack.c.b16 %v460, %v459
    %vm469 = vcmask 523264
    %v471 = vsel %vm469, %v429, 0
    %v474 = vsel %vm469, %v430, 0
    %v477 = vsel %vm469, %v431, 0
    %v480 = vsel %vm469, %v432, 0
    %482 = vmatprep.subr.bf16.mxu0 0
    %483 = vmatpush1.bf16.msra.mxu0 %v461
    %484 = vmatprep.subr.bf16.mxu0 0
    %485 = vmatpush1.bf16.msra.mxu0 %v462
    %486 = vmatprep.subr.bf16.mxu0 0
    %487 = vmatpush1.bf16.msra.mxu0 %v463
    %488 = vmatprep.subr.bf16.mxu0 0
    %489 = vmatpush1.bf16.msra.mxu0 %v464
    %490 = vmatprep.subr.bf16.mxu0 0
    %491 = vmatpush1.bf16.msra.mxu0 0
    %492 = vmatprep.subr.bf16.mxu0 0
    %493 = vmatpush1.bf16.msra.mxu0 0
    %494 = vmatprep.subr.bf16.mxu0 0
    %495 = vmatpush1.bf16.msra.mxu0 0
    %496 = vmatprep.subr.bf16.mxu0 0
    %497 = vmatpush1.bf16.msra.mxu0 0
    %498 = vmatprep.subr.bf16.mxu0 0
    %499 = vmatpush1.bf16.msra.mxu0 0
    %500 = vmatprep.subr.bf16.mxu0 0
    %501 = vmatpush1.bf16.msra.mxu0 0
    %502 = vmatprep.subr.bf16.mxu0 0
    %503 = vmatpush1.bf16.msra.mxu0 0
    %504 = vmatprep.subr.bf16.mxu0 0
    %505 = vmatpush1.bf16.msra.mxu0 0
    %506 = vmatprep.subr.bf16.mxu0 0
    %507 = vmatpush1.bf16.msra.mxu0 0
    %508 = vmatprep.subr.bf16.mxu0 0
    %509 = vmatpush1.bf16.msra.mxu0 0
    %510 = vmatprep.subr.bf16.mxu0 0
    %511 = vmatpush1.bf16.msra.mxu0 0
    %512 = vmatprep.subr.bf16.mxu0 0
    %513 = vmatpush1.bf16.msra.mxu0 0
    %514 = vmatprep.mubr.bf16.mxu0 0
    %515 = vmatmul.mubr.bf16.gmra.mrb[0].mxu0 %v471
    %v516 = vpop.f32.mrb[0].mxu0
    %v517 = vadd.f32 %v444, %v516
    %v518 = vpop.f32.mrb[0].mxu0
    %v519 = vpop.f32.mrb[0].mxu0
    %v520 = vadd.f32 %v444, %v519
    %v521 = vpop.f32.mrb[0].mxu0
    %522 = vmatprep.mubr.bf16.mxu0 0
    %523 = vmatmul.mubr.bf16.gmra.mrb[0].mxu0 %v474
    %v524 = vpop.f32.mrb[0].mxu0
    %v525 = vadd.f32 %v444, %v524
    %v526 = vpop.f32.mrb[0].mxu0
    %v527 = vpop.f32.mrb[0].mxu0
    %v528 = vadd.f32 %v444, %v527
    %v529 = vpop.f32.mrb[0].mxu0
    %530 = vmatprep.mubr.bf16.mxu0 0
    %531 = vmatmul.mubr.bf16.gmra.mrb[0].mxu0 %v477
    %v532 = vpop.f32.mrb[0].mxu0
    %v533 = vadd.f32 %v444, %v532
    %v534 = vpop.f32.mrb[0].mxu0
    %v535 = vpop.f32.mrb[0].mxu0
    %v536 = vadd.f32 %v444, %v535
    %v537 = vpop.f32.mrb[0].mxu0
    %538 = vmatprep.mubr.bf16.mxu0 0
    %539 = vmatmul.mubr.bf16.gmra.mrb[0].mxu0 %v480
    %v540 = vpop.f32.mrb[0].mxu0
    %v541 = vadd.f32 %v444, %v540
    %v542 = vpop.f32.mrb[0].mxu0
    %v543 = vpop.f32.mrb[0].mxu0
    %v544 = vadd.f32 %v444, %v543
    %v545 = vpop.f32.mrb[0].mxu0
    %546 = vdwg.mxu0
    %v547 = vmax.f32 %v517, 0.0
    %v548 = vmax.f32 %v520, 0.0
    %v549 = vmax.f32 %v525, 0.0
    %v550 = vmax.f32 %v528, 0.0
    %v551 = vmax.f32 %v533, 0.0
    %v552 = vmax.f32 %v536, 0.0
    %v553 = vmax.f32 %v541, 0.0
    %v554 = vmax.f32 %v544, 0.0
    %562 = vrot.lane.b32.xlu0 %v547, 112
    %v563 = vpop.permute.xlu0 %562
    %564 = vrot.lane.b32.xlu0 %v548, 112
    %v565 = vpop.permute.xlu0 %564
    %566 = vrot.lane.b32.xlu0 %v549, 112
    %v567 = vpop.permute.xlu0 %566
    %568 = vrot.lane.b32.xlu0 %v550, 112
    %v569 = vpop.permute.xlu0 %568
    %570 = vrot.lane.b32.xlu0 %v551, 112
    %v571 = vpop.permute.xlu0 %570
    %572 = vrot.lane.b32.xlu0 %v552, 112
    %v573 = vpop.permute.xlu0 %572
    %574 = vrot.lane.b32.xlu0 %v553, 112
    %v575 = vpop.permute.xlu0 %574
    %584 = vrot.lane.b32.xlu0 %v547, 16
    %v585 = vpop.permute.xlu0 %584
    %586 = vrot.lane.b32.xlu0 %v548, 16
    %v587 = vpop.permute.xlu0 %586
    %588 = vrot.lane.b32.xlu0 %v549, 16
    %v589 = vpop.permute.xlu0 %588
    %590 = vrot.lane.b32.xlu0 %v550, 16
    %v591 = vpop.permute.xlu0 %590
    %592 = vrot.lane.b32.xlu0 %v551, 16
    %v593 = vpop.permute.xlu0 %592
    %594 = vrot.lane.b32.xlu0 %v552, 16
    %v595 = vpop.permute.xlu0 %594
    %596 = vrot.lane.b32.xlu0 %v553, 16
    %v597 = vpop.permute.xlu0 %596
    %598 = vrot.lane.b32.xlu0 %v554, 16
    %v599 = vpop.permute.xlu0 %598
    %608 = vrot.lane.b32.xlu0 %v548, 48
    %v609 = vpop.permute.xlu0 %608
    %610 = vrot.lane.b32.xlu0 %v549, 48
    %v611 = vpop.permute.xlu0 %610
    %612 = vrot.lane.b32.xlu0 %v550, 48
    %v613 = vpop.permute.xlu0 %612
    %614 = vrot.lane.b32.xlu0 %v551, 48
    %v615 = vpop.permute.xlu0 %614
    %616 = vrot.lane.b32.xlu0 %v552, 48
    %v617 = vpop.permute.xlu0 %616
    %618 = vrot.lane.b32.xlu0 %v553, 48
    %v619 = vpop.permute.xlu0 %618
    %620 = vrot.lane.b32.xlu0 %v554, 48
    %v621 = vpop.permute.xlu0 %620
    %v629 = vsel %vm411, 0.0, %v585
    %v630 = vsel %vm411, %v563, %v587
    %v631 = vsel %vm411, %v565, %v589
    %v632 = vsel %vm411, %v567, %v591
    %v633 = vsel %vm411, %v569, %v593
    %v634 = vsel %vm411, %v571, %v595
    %v635 = vsel %vm411, %v573, %v597
    %v636 = vsel %vm411, %v575, %v599
    %v637 = vsel %vm420, %v629, %v609
    %v638 = vsel %vm420, %v630, %v611
    %v639 = vsel %vm420, %v631, %v613
    %v640 = vsel %vm420, %v632, %v615
    %v641 = vsel %vm420, %v633, %v617
    %v642 = vsel %vm420, %v634, %v619
    %v643 = vsel %vm420, %v635, %v621
    %v644 = vsel %vm420, %v636, %v402
    %v645 = vpack.c.bf16 %v638, %v637
    %v646 = vpack.c.bf16 %v640, %v639
    %v647 = vpack.c.bf16 %v642, %v641
    %v648 = vpack.c.bf16 %v644, %v643
    %v649 = vld [vmem:[%s3] sm:$0xf]
    %v650 = vld [vmem:[%s3 + $0x4] sm:$0xf]
    %v651 = vld [vmem:[%s3 + $0x8] sm:$0xf]
    %v652 = vld [vmem:[%s3 + $0xc] sm:$0xf]
    %v653 = vld [vmem:[%s3 + $0x10] sm:$0xf]
    %v654 = vld [vmem:[%s3 + $0x14] sm:$0xf]
    %v655 = vld [vmem:[%s3 + $0x18] sm:$0xf]
    %v656 = vld [vmem:[%s3 + $0x1c] sm:$0xf]
    %v657 = vlaneseq
    %v658 = vshrl.u32 %v657, 7
    %v659 = vsub.s32 2, %v658
    %v660 = vrot.slane %v81, %v659
    %v669 = vunpack.c.l.b16 %v649
    %v670 = vunpack.c.l.b16 %v650
    %v671 = vunpack.c.l.b16 %v651
    %v672 = vunpack.c.l.b16 %v652
    %v673 = vunpack.c.l.b16 %v653
    %v674 = vunpack.c.l.b16 %v654
    %v675 = vunpack.c.l.b16 %v655
    %v676 = vunpack.c.l.b16 %v656
    %v677 = vpack.c.b16 %v670, %v669
    %v678 = vpack.c.b16 %v672, %v671
    %v679 = vpack.c.b16 %v674, %v673
    %v680 = vpack.c.b16 %v676, %v675
    %v686 = vsel %vm469, %v645, 0
    %v689 = vsel %vm469, %v646, 0
    %v692 = vsel %vm469, %v647, 0
    %v695 = vsel %vm469, %v648, 0
    %697 = vmatprep.subr.bf16.mxu0 0
    %698 = vmatpush1.bf16.msra.mxu0 %v677
    %699 = vmatprep.subr.bf16.mxu0 0
    %700 = vmatpush1.bf16.msra.mxu0 %v678
    %701 = vmatprep.subr.bf16.mxu0 0
    %702 = vmatpush1.bf16.msra.mxu0 %v679
    %703 = vmatprep.subr.bf16.mxu0 0
    %704 = vmatpush1.bf16.msra.mxu0 %v680
    %705 = vmatprep.subr.bf16.mxu0 0
    %706 = vmatpush1.bf16.msra.mxu0 0
    %707 = vmatprep.subr.bf16.mxu0 0
    %708 = vmatpush1.bf16.msra.mxu0 0
    %709 = vmatprep.subr.bf16.mxu0 0
    %710 = vmatpush1.bf16.msra.mxu0 0
    %711 = vmatprep.subr.bf16.mxu0 0
    %712 = vmatpush1.bf16.msra.mxu0 0
    %713 = vmatprep.subr.bf16.mxu0 0
    %714 = vmatpush1.bf16.msra.mxu0 0
    %715 = vmatprep.subr.bf16.mxu0 0
    %716 = vmatpush1.bf16.msra.mxu0 0
    %717 = vmatprep.subr.bf16.mxu0 0
    %718 = vmatpush1.bf16.msra.mxu0 0
    %719 = vmatprep.subr.bf16.mxu0 0
    %720 = vmatpush1.bf16.msra.mxu0 0
    %721 = vmatprep.subr.bf16.mxu0 0
    %722 = vmatpush1.bf16.msra.mxu0 0
    %723 = vmatprep.subr.bf16.mxu0 0
    %724 = vmatpush1.bf16.msra.mxu0 0
    %725 = vmatprep.subr.bf16.mxu0 0
    %726 = vmatpush1.bf16.msra.mxu0 0
    %727 = vmatprep.subr.bf16.mxu0 0
    %728 = vmatpush1.bf16.msra.mxu0 0
    %729 = vmatprep.mubr.bf16.mxu0 0
    %730 = vmatmul.mubr.bf16.gmra.mrb[0].mxu0 %v686
    %v731 = vpop.f32.mrb[0].mxu0
    %v732 = vadd.f32 %v660, %v731
    %v733 = vpop.f32.mrb[0].mxu0
    %v734 = vpop.f32.mrb[0].mxu0
    %v735 = vadd.f32 %v660, %v734
    %v736 = vpop.f32.mrb[0].mxu0
    %737 = vmatprep.mubr.bf16.mxu0 0
    %738 = vmatmul.mubr.bf16.gmra.mrb[0].mxu0 %v689
    %v739 = vpop.f32.mrb[0].mxu0
    %v740 = vadd.f32 %v660, %v739
    %v741 = vpop.f32.mrb[0].mxu0
    %v742 = vpop.f32.mrb[0].mxu0
    %v743 = vadd.f32 %v660, %v742
    %v744 = vpop.f32.mrb[0].mxu0
    %745 = vmatprep.mubr.bf16.mxu0 0
    %746 = vmatmul.mubr.bf16.gmra.mrb[0].mxu0 %v692
    %v747 = vpop.f32.mrb[0].mxu0
    %v748 = vadd.f32 %v660, %v747
    %v749 = vpop.f32.mrb[0].mxu0
    %v750 = vpop.f32.mrb[0].mxu0
    %v751 = vadd.f32 %v660, %v750
    %v752 = vpop.f32.mrb[0].mxu0
    %753 = vmatprep.mubr.bf16.mxu0 0
    %754 = vmatmul.mubr.bf16.gmra.mrb[0].mxu0 %v695
    %v755 = vpop.f32.mrb[0].mxu0
    %v756 = vadd.f32 %v660, %v755
    %v757 = vpop.f32.mrb[0].mxu0
    %v758 = vpop.f32.mrb[0].mxu0
    %v759 = vadd.f32 %v660, %v758
    %v760 = vpop.f32.mrb[0].mxu0
    %761 = vdwg.mxu0
    %v762 = vld [vmem:[#allocation2] sm:$0xff]
    %v763 = vld [vmem:[#allocation2 + $0x8] sm:$0xff]
    %v764 = vld [vmem:[#allocation2 + $0x10] sm:$0xff]
    %v765 = vld [vmem:[#allocation2 + $0x18] sm:$0xff]
    %v766 = vlaneseq
    %v767 = vshrl.u32 %v766, 7
    %v768 = vsub.s32 3, %v767
    %v769 = vrot.slane %v81, %v768
    %vm770 = vcmask 261120
    %v771 = vsel %vm770, %v326, 0
    %v773 = vsel %vm770, %v327, 0
    %v775 = vsel %vm770, %v328, 0
    %v777 = vsel %vm770, %v329, 0
    %v779 = vsel %vm770, %v330, 0
    %v781 = vsel %vm770, %v331, 0
    %v783 = vsel %vm770, %v332, 0
    %v785 = vsel %vm770, %v333, 0
    %787 = vmatprep.subr.mxu0 0.0
    %788 = vmatpush1.msra.mxu0 %v762
    %789 = vmatprep.subr.mxu0 0.0
    %790 = vmatpush1.msra.mxu0 %v763
    %791 = vmatprep.subr.mxu0 0.0
    %792 = vmatpush1.msra.mxu0 %v764
    %793 = vmatprep.subr.mxu0 0.0
    %794 = vmatpush1.msra.mxu0 %v765
    %795 = vmatprep.subr.mxu0 0.0
    %796 = vmatpush1.msra.mxu0 0.0
    %797 = vmatprep.subr.mxu0 0.0
    %798 = vmatpush1.msra.mxu0 0.0
    %799 = vmatprep.subr.mxu0 0.0
    %800 = vmatpush1.msra.mxu0 0.0
    %801 = vmatprep.subr.mxu0 0.0
    %802 = vmatpush1.msra.mxu0 0.0
    %803 = vmatprep.subr.mxu0 0.0
    %804 = vmatpush1.msra.mxu0 0.0
    %805 = vmatprep.subr.mxu0 0.0
    %806 = vmatpush1.msra.mxu0 0.0
    %807 = vmatprep.subr.mxu0 0.0
    %808 = vmatpush1.msra.mxu0 0.0
    %809 = vmatprep.subr.mxu0 0.0
    %810 = vmatpush1.msra.mxu0 0.0
    %811 = vmatprep.subr.mxu0 0.0
    %812 = vmatpush1.msra.mxu0 0.0
    %813 = vmatprep.subr.mxu0 0.0
    %814 = vmatpush1.msra.mxu0 0.0
    %815 = vmatprep.subr.mxu0 0.0
    %816 = vmatpush1.msra.mxu0 0.0
    %817 = vmatprep.subr.mxu0 0.0
    %818 = vmatpush1.msra.mxu0 0.0
    %819 = vmatprep.subr.mxu0 0.0
    %820 = vmatpush1.msra.mxu0 0.0
    %821 = vmatprep.subr.mxu0 0.0
    %822 = vmatpush1.msra.mxu0 0.0
    %823 = vmatprep.subr.mxu0 0.0
    %824 = vmatpush1.msra.mxu0 0.0
    %825 = vmatprep.subr.mxu0 0.0
    %826 = vmatpush1.msra.mxu0 0.0
    %827 = vmatprep.subr.mxu0 0.0
    %828 = vmatpush1.msra.mxu0 0.0
    %829 = vmatprep.subr.mxu0 0.0
    %830 = vmatpush1.msra.mxu0 0.0
    %831 = vmatprep.subr.mxu0 0.0
    %832 = vmatpush1.msra.mxu0 0.0
    %833 = vmatprep.subr.mxu0 0.0
    %834 = vmatpush1.msra.mxu0 0.0
    %835 = vmatprep.subr.mxu0 0.0
    %836 = vmatpush1.msra.mxu0 0.0
    %837 = vmatprep.subr.mxu0 0.0
    %838 = vmatpush1.msra.mxu0 0.0
    %839 = vmatprep.subr.mxu0 0.0
    %840 = vmatpush1.msra.mxu0 0.0
    %841 = vmatprep.subr.mxu0 0.0
    %842 = vmatpush1.msra.mxu0 0.0
    %843 = vmatprep.subr.mxu0 0.0
    %844 = vmatpush1.msra.mxu0 0.0
    %845 = vmatprep.subr.mxu0 0.0
    %846 = vmatpush1.msra.mxu0 0.0
    %847 = vmatprep.subr.mxu0 0.0
    %848 = vmatpush1.msra.mxu0 0.0
    %849 = vmatprep.subr.mxu0 0.0
    %850 = vmatpush1.msra.mxu0 0.0
    %851 = vmatprep.mubr.f32.mxu0 0.0
    %852 = vmatmul.mubr.f32.gmra.mrb[0].mxu0 %v771
    %v853 = vpop.f32.mrb[0].mxu0
    %v854 = vadd.f32 %v769, %v853
    %v855 = vpop.f32.mrb[0].mxu0
    %856 = vmatprep.mubr.f32.mxu0 0.0
    %857 = vmatmul.mubr.f32.gmra.mrb[0].mxu0 %v773
    %v858 = vpop.f32.mrb[0].mxu0
    %v859 = vadd.f32 %v769, %v858
    %v860 = vpop.f32.mrb[0].mxu0
    %861 = vmatprep.mubr.f32.mxu0 0.0
    %862 = vmatmul.mubr.f32.gmra.mrb[0].mxu0 %v775
    %v863 = vpop.f32.mrb[0].mxu0
    %v864 = vadd.f32 %v769, %v863
    %v865 = vpop.f32.mrb[0].mxu0
    %866 = vmatprep.mubr.f32.mxu0 0.0
    %867 = vmatmul.mubr.f32.gmra.mrb[0].mxu0 %v777
    %v868 = vpop.f32.mrb[0].mxu0
    %v869 = vadd.f32 %v769, %v868
    %v870 = vpop.f32.mrb[0].mxu0
    %871 = vmatprep.mubr.f32.mxu0 0.0
    %872 = vmatmul.mubr.f32.gmra.mrb[0].mxu0 %v779
    %v873 = vpop.f32.mrb[0].mxu0
    %v874 = vadd.f32 %v769, %v873
    %v875 = vpop.f32.mrb[0].mxu0
    %876 = vmatprep.mubr.f32.mxu0 0.0
    %877 = vmatmul.mubr.f32.gmra.mrb[0].mxu0 %v781
    %v878 = vpop.f32.mrb[0].mxu0
    %v879 = vadd.f32 %v769, %v878
    %v880 = vpop.f32.mrb[0].mxu0
    %881 = vmatprep.mubr.f32.mxu0 0.0
    %882 = vmatmul.mubr.f32.gmra.mrb[0].mxu0 %v783
    %v883 = vpop.f32.mrb[0].mxu0
    %v884 = vadd.f32 %v769, %v883
    %v885 = vpop.f32.mrb[0].mxu0
    %886 = vmatprep.mubr.f32.mxu0 0.0
    %887 = vmatmul.mubr.f32.gmra.mrb[0].mxu0 %v785
    %v888 = vpop.f32.mrb[0].mxu0
    %v889 = vadd.f32 %v769, %v888
    %v890 = vpop.f32.mrb[0].mxu0
    %891 = vdwg.mxu0
    %v892 = vadd.f32 %v732, %v854
    %v893 = vadd.f32 %v735, %v859
    %v894 = vadd.f32 %v740, %v864
    %v895 = vadd.f32 %v743, %v869
    %v896 = vadd.f32 %v748, %v874
    %v897 = vadd.f32 %v751, %v879
    %v898 = vadd.f32 %v756, %v884
    %v899 = vadd.f32 %v759, %v889
    %v900 = vmax.f32 %v892, 0.0
    %v901 = vmax.f32 %v893, 0.0
    %v902 = vmax.f32 %v894, 0.0
    %v903 = vmax.f32 %v895, 0.0
    %v904 = vmax.f32 %v896, 0.0
    %v905 = vmax.f32 %v897, 0.0
    %v906 = vmax.f32 %v898, 0.0
    %v907 = vmax.f32 %v899, 0.0
    %915 = vrot.lane.b32.xlu0 %v900, 112
    %v916 = vpop.permute.xlu0 %915
    %917 = vrot.lane.b32.xlu0 %v901, 112
    %v918 = vpop.permute.xlu0 %917
    %919 = vrot.lane.b32.xlu0 %v902, 112
    %v920 = vpop.permute.xlu0 %919
    %921 = vrot.lane.b32.xlu0 %v903, 112
    %v922 = vpop.permute.xlu0 %921
    %923 = vrot.lane.b32.xlu0 %v904, 112
    %v924 = vpop.permute.xlu0 %923
    %925 = vrot.lane.b32.xlu0 %v905, 112
    %v926 = vpop.permute.xlu0 %925
    %927 = vrot.lane.b32.xlu0 %v906, 112
    %v928 = vpop.permute.xlu0 %927
    %937 = vrot.lane.b32.xlu0 %v900, 16
    %v938 = vpop.permute.xlu0 %937
    %939 = vrot.lane.b32.xlu0 %v901, 16
    %v940 = vpop.permute.xlu0 %939
    %941 = vrot.lane.b32.xlu0 %v902, 16
    %v942 = vpop.permute.xlu0 %941
    %943 = vrot.lane.b32.xlu0 %v903, 16
    %v944 = vpop.permute.xlu0 %943
    %945 = vrot.lane.b32.xlu0 %v904, 16
    %v946 = vpop.permute.xlu0 %945
    %947 = vrot.lane.b32.xlu0 %v905, 16
    %v948 = vpop.permute.xlu0 %947
    %949 = vrot.lane.b32.xlu0 %v906, 16
    %v950 = vpop.permute.xlu0 %949
    %951 = vrot.lane.b32.xlu0 %v907, 16
    %v952 = vpop.permute.xlu0 %951
    %v961 = vsel %vm411, 0.0, %v938
    %v962 = vsel %vm411, %v916, %v940
    %v963 = vsel %vm411, %v918, %v942
    %v964 = vsel %vm411, %v920, %v944
    %v965 = vsel %vm411, %v922, %v946
    %v966 = vsel %vm411, %v924, %v948
    %v967 = vsel %vm411, %v926, %v950
    %v968 = vsel %vm411, %v928, %v952
    %v969 = vpack.c.bf16 %v962, %v961
    %v970 = vpack.c.bf16 %v964, %v963
    %v971 = vpack.c.bf16 %v966, %v965
    %v972 = vpack.c.bf16 %v968, %v967
    %v973 = vld [vmem:[%s5] sm:$0xf]
    %v974 = vld [vmem:[%s5 + $0x4] sm:$0xf]
    %v975 = vld [vmem:[%s5 + $0x8] sm:$0xf]
    %v976 = vld [vmem:[%s5 + $0xc] sm:$0xf]
    %v977 = vld [vmem:[%s5 + $0x10] sm:$0xf]
    %v978 = vld [vmem:[%s5 + $0x14] sm:$0xf]
    %v979 = vlaneseq
    %v980 = vshrl.u32 %v979, 7
    %v981 = vsub.s32 4, %v980
    %v982 = vrot.slane %v81, %v981
    %v989 = vunpack.c.l.b16 %v973
    %v990 = vunpack.c.l.b16 %v974
    %v991 = vunpack.c.l.b16 %v975
    %v992 = vunpack.c.l.b16 %v976
    %v993 = vunpack.c.l.b16 %v977
    %v994 = vunpack.c.l.b16 %v978
    %v995 = vpack.c.b16 %v990, %v989
    %v996 = vpack.c.b16 %v992, %v991
    %v997 = vpack.c.b16 %v994, %v993
    %v1002 = vsel %vm420, %v969, 0
    %v1005 = vsel %vm420, %v970, 0
    %v1008 = vsel %vm420, %v971, 0
    %v1011 = vsel %vm420, %v972, 0
    %1013 = vmatprep.subr.bf16.mxu0 0
    %1014 = vmatpush1.bf16.msra.mxu0 %v995
    %1015 = vmatprep.subr.bf16.mxu0 0
    %1016 = vmatpush1.bf16.msra.mxu0 %v996
    %1017 = vmatprep.subr.bf16.mxu0 0
    %1018 = vmatpush1.bf16.msra.mxu0 %v997
    %1019 = vmatprep.subr.bf16.mxu0 0
    %1020 = vmatpush1.bf16.msra.mxu0 0
    %1021 = vmatprep.subr.bf16.mxu0 0
    %1022 = vmatpush1.bf16.msra.mxu0 0
    %1023 = vmatprep.subr.bf16.mxu0 0
    %1024 = vmatpush1.bf16.msra.mxu0 0
    %1025 = vmatprep.subr.bf16.mxu0 0
    %1026 = vmatpush1.bf16.msra.mxu0 0
    %1027 = vmatprep.subr.bf16.mxu0 0
    %1028 = vmatpush1.bf16.msra.mxu0 0
    %1029 = vmatprep.subr.bf16.mxu0 0
    %1030 = vmatpush1.bf16.msra.mxu0 0
    %1031 = vmatprep.subr.bf16.mxu0 0
    %1032 = vmatpush1.bf16.msra.mxu0 0
    %1033 = vmatprep.subr.bf16.mxu0 0
    %1034 = vmatpush1.bf16.msra.mxu0 0
    %1035 = vmatprep.subr.bf16.mxu0 0
    %1036 = vmatpush1.bf16.msra.mxu0 0
    %1037 = vmatprep.subr.bf16.mxu0 0
    %1038 = vmatpush1.bf16.msra.mxu0 0
    %1039 = vmatprep.subr.bf16.mxu0 0
    %1040 = vmatpush1.bf16.msra.mxu0 0
    %1041 = vmatprep.subr.bf16.mxu0 0
    %1042 = vmatpush1.bf16.msra.mxu0 0
    %1043 = vmatprep.subr.bf16.mxu0 0
    %1044 = vmatpush1.bf16.msra.mxu0 0
    %1045 = vmatprep.mubr.bf16.mxu0 0
    %1046 = vmatmul.mubr.bf16.gmra.mrb[0].mxu0 %v1002
    %v1047 = vpop.f32.mrb[0].mxu0
    %v1048 = vadd.f32 %v982, %v1047
    %v1049 = vpop.f32.mrb[0].mxu0
    %v1050 = vpop.f32.mrb[0].mxu0
    %v1051 = vadd.f32 %v982, %v1050
    %v1052 = vpop.f32.mrb[0].mxu0
    %1053 = vmatprep.mubr.bf16.mxu0 0
    %1054 = vmatmul.mubr.bf16.gmra.mrb[0].mxu0 %v1005
    %v1055 = vpop.f32.mrb[0].mxu0
    %v1056 = vadd.f32 %v982, %v1055
    %v1057 = vpop.f32.mrb[0].mxu0
    %v1058 = vpop.f32.mrb[0].mxu0
    %v1059 = vadd.f32 %v982, %v1058
    %v1060 = vpop.f32.mrb[0].mxu0
    %1061 = vmatprep.mubr.bf16.mxu0 0
    %1062 = vmatmul.mubr.bf16.gmra.mrb[0].mxu0 %v1008
    %v1063 = vpop.f32.mrb[0].mxu0
    %v1064 = vadd.f32 %v982, %v1063
    %v1065 = vpop.f32.mrb[0].mxu0
    %v1066 = vpop.f32.mrb[0].mxu0
    %v1067 = vadd.f32 %v982, %v1066
    %v1068 = vpop.f32.mrb[0].mxu0
    %1069 = vmatprep.mubr.bf16.mxu0 0
    %1070 = vmatmul.mubr.bf16.gmra.mrb[0].mxu0 %v1011
    %v1071 = vpop.f32.mrb[0].mxu0
    %v1072 = vadd.f32 %v982, %v1071
    %v1073 = vpop.f32.mrb[0].mxu0
    %v1074 = vpop.f32.mrb[0].mxu0
    %v1075 = vadd.f32 %v982, %v1074
    %v1076 = vpop.f32.mrb[0].mxu0
    %1077 = vdwg.mxu0
    %v1078 = vmax.f32 %v1048, 0.0
    %v1079 = vmax.f32 %v1051, 0.0
    %v1080 = vmax.f32 %v1056, 0.0
    %v1081 = vmax.f32 %v1059, 0.0
    %v1082 = vmax.f32 %v1064, 0.0
    %v1083 = vmax.f32 %v1067, 0.0
    %v1084 = vmax.f32 %v1072, 0.0
    %v1085 = vmax.f32 %v1075, 0.0
    %1094 = vrot.lane.b32.xlu0 %v1078, 32
    %v1095 = vpop.permute.xlu0 %1094
    %1096 = vrot.lane.b32.xlu0 %v1079, 32
    %v1097 = vpop.permute.xlu0 %1096
    %1098 = vrot.lane.b32.xlu0 %v1080, 32
    %v1099 = vpop.permute.xlu0 %1098
    %1100 = vrot.lane.b32.xlu0 %v1081, 32
    %v1101 = vpop.permute.xlu0 %1100
    %1102 = vrot.lane.b32.xlu0 %v1082, 32
    %v1103 = vpop.permute.xlu0 %1102
    %1104 = vrot.lane.b32.xlu0 %v1083, 32
    %v1105 = vpop.permute.xlu0 %1104
    %1106 = vrot.lane.b32.xlu0 %v1084, 32
    %v1107 = vpop.permute.xlu0 %1106
    %1108 = vrot.lane.b32.xlu0 %v1085, 32
    %v1109 = vpop.permute.xlu0 %1108
    %1118 = vrot.lane.b32.xlu0 %v1079, 64
    %v1119 = vpop.permute.xlu0 %1118
    %1120 = vrot.lane.b32.xlu0 %v1080, 64
    %v1121 = vpop.permute.xlu0 %1120
    %1122 = vrot.lane.b32.xlu0 %v1081, 64
    %v1123 = vpop.permute.xlu0 %1122
    %1124 = vrot.lane.b32.xlu0 %v1082, 64
    %v1125 = vpop.permute.xlu0 %1124
    %1126 = vrot.lane.b32.xlu0 %v1083, 64
    %v1127 = vpop.permute.xlu0 %1126
    %1128 = vrot.lane.b32.xlu0 %v1084, 64
    %v1129 = vpop.permute.xlu0 %1128
    %1130 = vrot.lane.b32.xlu0 %v1085, 64
    %v1131 = vpop.permute.xlu0 %1130
    %1132 = vrot.lane.b32.xlu0 0.0, 64
    %v1133 = vpop.permute.xlu0 %1132
    %v1142 = vsel %vm770, 0.0, %v1095
    %v1143 = vsel %vm770, %v1078, %v1097
    %v1144 = vsel %vm770, %v1079, %v1099
    %v1145 = vsel %vm770, %v1080, %v1101
    %v1146 = vsel %vm770, %v1081, %v1103
    %v1147 = vsel %vm770, %v1082, %v1105
    %v1148 = vsel %vm770, %v1083, %v1107
    %v1149 = vsel %vm770, %v1084, %v1109
    %v1150 = vsel %vm469, %v1142, %v1119
    %v1151 = vsel %vm469, %v1143, %v1121
    %v1152 = vsel %vm469, %v1144, %v1123
    %v1153 = vsel %vm469, %v1145, %v1125
    %v1154 = vsel %vm469, %v1146, %v1127
    %v1155 = vsel %vm469, %v1147, %v1129
    %v1156 = vsel %vm469, %v1148, %v1131
    %v1157 = vsel %vm469, %v1149, %v1133
    %v1158 = vpack.c.bf16 %v1151, %v1150
    %v1159 = vpack.c.bf16 %v1153, %v1152
    %v1160 = vpack.c.bf16 %v1155, %v1154
    %v1161 = vpack.c.bf16 %v1157, %v1156
    %v1162 = vld [vmem:[%s6] sm:$0xf]
    %v1163 = vld [vmem:[%s6 + $0x4] sm:$0xf]
    %v1164 = vld [vmem:[%s6 + $0x8] sm:$0xf]
    %v1165 = vld [vmem:[%s6 + $0xc] sm:$0xf]
    %v1166 = vld [vmem:[%s6 + $0x10] sm:$0xf]
    %v1167 = vld [vmem:[%s6 + $0x14] sm:$0xf]
    %v1168 = vld [vmem:[%s6 + $0x18] sm:$0xf]
    %v1169 = vld [vmem:[%s6 + $0x1c] sm:$0xf]
    %v1170 = vld [vmem:[%s6 + $0x20] sm:$0xf]
    %v1171 = vld [vmem:[%s6 + $0x24] sm:$0xf]
    %v1172 = vld [vmem:[%s6 + $0x28] sm:$0xf]
    %v1173 = vld [vmem:[%s6 + $0x2c] sm:$0xf]
    %v1174 = vlaneseq
    %v1175 = vshrl.u32 %v1174, 7
    %v1176 = vsub.s32 5, %v1175
    %v1177 = vrot.slane %v81, %v1176
    %v1190 = vunpack.c.l.b16 %v1162
    %v1191 = vunpack.c.l.b16 %v1163
    %v1192 = vunpack.c.l.b16 %v1164
    %v1193 = vunpack.c.l.b16 %v1165
    %v1194 = vunpack.c.l.b16 %v1166
    %v1195 = vunpack.c.l.b16 %v1167
    %v1196 = vunpack.c.l.b16 %v1168
    %v1197 = vunpack.c.l.b16 %v1169
    %v1198 = vunpack.c.l.b16 %v1170
    %v1199 = vunpack.c.l.b16 %v1171
    %v1200 = vunpack.c.l.b16 %v1172
    %v1201 = vunpack.c.l.b16 %v1173
    %v1202 = vpack.c.b16 %v1191, %v1190
    %v1203 = vpack.c.b16 %v1193, %v1192
    %v1204 = vpack.c.b16 %v1195, %v1194
    %v1205 = vpack.c.b16 %v1197, %v1196
    %v1206 = vpack.c.b16 %v1199, %v1198
    %v1207 = vpack.c.b16 %v1201, %v1200
    %vm1214 = vcmask 785408
    %v1216 = vsel %vm1214, %v1158, 0
    %v1219 = vsel %vm1214, %v1159, 0
    %v1222 = vsel %vm1214, %v1160, 0
    %v1225 = vsel %vm1214, %v1161, 0
    %1227 = vmatprep.subr.bf16.mxu0 0
    %1228 = vmatpush1.bf16.msra.mxu0 %v1202
    %1229 = vmatprep.subr.bf16.mxu0 0
    %1230 = vmatpush1.bf16.msra.mxu0 %v1203
    %1231 = vmatprep.subr.bf16.mxu0 0
    %1232 = vmatpush1.bf16.msra.mxu0 %v1204
    %1233 = vmatprep.subr.bf16.mxu0 0
    %1234 = vmatpush1.bf16.msra.mxu0 %v1205
    %1235 = vmatprep.subr.bf16.mxu0 0
    %1236 = vmatpush1.bf16.msra.mxu0 %v1206
    %1237 = vmatprep.subr.bf16.mxu0 0
    %1238 = vmatpush1.bf16.msra.mxu0 %v1207
    %1239 = vmatprep.subr.bf16.mxu0 0
    %1240 = vmatpush1.bf16.msra.mxu0 0
    %1241 = vmatprep.subr.bf16.mxu0 0
    %1242 = vmatpush1.bf16.msra.mxu0 0
    %1243 = vmatprep.subr.bf16.mxu0 0
    %1244 = vmatpush1.bf16.msra.mxu0 0
    %1245 = vmatprep.subr.bf16.mxu0 0
    %1246 = vmatpush1.bf16.msra.mxu0 0
    %1247 = vmatprep.subr.bf16.mxu0 0
    %1248 = vmatpush1.bf16.msra.mxu0 0
    %1249 = vmatprep.subr.bf16.mxu0 0
    %1250 = vmatpush1.bf16.msra.mxu0 0
    %1251 = vmatprep.subr.bf16.mxu0 0
    %1252 = vmatpush1.bf16.msra.mxu0 0
    %1253 = vmatprep.subr.bf16.mxu0 0
    %1254 = vmatpush1.bf16.msra.mxu0 0
    %1255 = vmatprep.subr.bf16.mxu0 0
    %1256 = vmatpush1.bf16.msra.mxu0 0
    %1257 = vmatprep.subr.bf16.mxu0 0
    %1258 = vmatpush1.bf16.msra.mxu0 0
    %1259 = vmatprep.mubr.bf16.mxu0 0
    %1260 = vmatmul.mubr.bf16.gmra.mrb[0].mxu0 %v1216
    %v1261 = vpop.f32.mrb[0].mxu0
    %v1262 = vadd.f32 %v1177, %v1261
    %v1263 = vpop.f32.mrb[0].mxu0
    %v1264 = vpop.f32.mrb[0].mxu0
    %v1265 = vadd.f32 %v1177, %v1264
    %v1266 = vpop.f32.mrb[0].mxu0
    %1267 = vmatprep.mubr.bf16.mxu0 0
    %1268 = vmatmul.mubr.bf16.gmra.mrb[0].mxu0 %v1219
    %v1269 = vpop.f32.mrb[0].mxu0
    %v1270 = vadd.f32 %v1177, %v1269
    %v1271 = vpop.f32.mrb[0].mxu0
    %v1272 = vpop.f32.mrb[0].mxu0
    %v1273 = vadd.f32 %v1177, %v1272
    %v1274 = vpop.f32.mrb[0].mxu0
    %1275 = vmatprep.mubr.bf16.mxu0 0
    %1276 = vmatmul.mubr.bf16.gmra.mrb[0].mxu0 %v1222
    %v1277 = vpop.f32.mrb[0].mxu0
    %v1278 = vadd.f32 %v1177, %v1277
    %v1279 = vpop.f32.mrb[0].mxu0
    %v1280 = vpop.f32.mrb[0].mxu0
    %v1281 = vadd.f32 %v1177, %v1280
    %v1282 = vpop.f32.mrb[0].mxu0
    %1283 = vmatprep.mubr.bf16.mxu0 0
    %1284 = vmatmul.mubr.bf16.gmra.mrb[0].mxu0 %v1225
    %v1285 = vpop.f32.mrb[0].mxu0
    %v1286 = vadd.f32 %v1177, %v1285
    %v1287 = vpop.f32.mrb[0].mxu0
    %v1288 = vpop.f32.mrb[0].mxu0
    %v1289 = vadd.f32 %v1177, %v1288
    %v1290 = vpop.f32.mrb[0].mxu0
    %1291 = vdwg.mxu0
    %v1292 = vld [vmem:[#allocation5] sm:$0xff]
    %v1293 = vld [vmem:[#allocation5 + $0x8] sm:$0xff]
    %v1294 = vlaneseq
    %v1295 = vshrl.u32 %v1294, 7
    %v1296 = vsub.s32 6, %v1295
    %v1297 = vrot.slane %v81, %v1296
    %v1298 = vsel %vm411, %v900, 0
    %v1300 = vsel %vm411, %v901, 0
    %v1302 = vsel %vm411, %v902, 0
    %v1304 = vsel %vm411, %v903, 0
    %v1306 = vsel %vm411, %v904, 0
    %v1308 = vsel %vm411, %v905, 0
    %v1310 = vsel %vm411, %v906, 0
    %v1312 = vsel %vm411, %v907, 0
    %1314 = vmatprep.subr.mxu0 0.0
    %1315 = vmatpush1.msra.mxu0 %v1292
    %1316 = vmatprep.subr.mxu0 0.0
    %1317 = vmatpush1.msra.mxu0 %v1293
    %1318 = vmatprep.subr.mxu0 0.0
    %1319 = vmatpush1.msra.mxu0 0.0
    %1320 = vmatprep.subr.mxu0 0.0
    %1321 = vmatpush1.msra.mxu0 0.0
    %1322 = vmatprep.subr.mxu0 0.0
    %1323 = vmatpush1.msra.mxu0 0.0
    %1324 = vmatprep.subr.mxu0 0.0
    %1325 = vmatpush1.msra.mxu0 0.0
    %1326 = vmatprep.subr.mxu0 0.0
    %1327 = vmatpush1.msra.mxu0 0.0
    %1328 = vmatprep.subr.mxu0 0.0
    %1329 = vmatpush1.msra.mxu0 0.0
    %1330 = vmatprep.subr.mxu0 0.0
    %1331 = vmatpush1.msra.mxu0 0.0
    %1332 = vmatprep.subr.mxu0 0.0
    %1333 = vmatpush1.msra.mxu0 0.0
    %1334 = vmatprep.subr.mxu0 0.0
    %1335 = vmatpush1.msra.mxu0 0.0
    %1336 = vmatprep.subr.mxu0 0.0
    %1337 = vmatpush1.msra.mxu0 0.0
    %1338 = vmatprep.subr.mxu0 0.0
    %1339 = vmatpush1.msra.mxu0 0.0
    %1340 = vmatprep.subr.mxu0 0.0
    %1341 = vmatpush1.msra.mxu0 0.0
    %1342 = vmatprep.subr.mxu0 0.0
    %1343 = vmatpush1.msra.mxu0 0.0
    %1344 = vmatprep.subr.mxu0 0.0
    %1345 = vmatpush1.msra.mxu0 0.0
    %1346 = vmatprep.subr.mxu0 0.0
    %1347 = vmatpush1.msra.mxu0 0.0
    %1348 = vmatprep.subr.mxu0 0.0
    %1349 = vmatpush1.msra.mxu0 0.0
    %1350 = vmatprep.subr.mxu0 0.0
    %1351 = vmatpush1.msra.mxu0 0.0
    %1352 = vmatprep.subr.mxu0 0.0
    %1353 = vmatpush1.msra.mxu0 0.0
    %1354 = vmatprep.subr.mxu0 0.0
    %1355 = vmatpush1.msra.mxu0 0.0
    %1356 = vmatprep.subr.mxu0 0.0
    %1357 = vmatpush1.msra.mxu0 0.0
    %1358 = vmatprep.subr.mxu0 0.0
    %1359 = vmatpush1.msra.mxu0 0.0
    %1360 = vmatprep.subr.mxu0 0.0
    %1361 = vmatpush1.msra.mxu0 0.0
    %1362 = vmatprep.subr.mxu0 0.0
    %1363 = vmatpush1.msra.mxu0 0.0
    %1364 = vmatprep.subr.mxu0 0.0
    %1365 = vmatpush1.msra.mxu0 0.0
    %1366 = vmatprep.subr.mxu0 0.0
    %1367 = vmatpush1.msra.mxu0 0.0
    %1368 = vmatprep.subr.mxu0 0.0
    %1369 = vmatpush1.msra.mxu0 0.0
    %1370 = vmatprep.subr.mxu0 0.0
    %1371 = vmatpush1.msra.mxu0 0.0
    %1372 = vmatprep.subr.mxu0 0.0
    %1373 = vmatpush1.msra.mxu0 0.0
    %1374 = vmatprep.subr.mxu0 0.0
    %1375 = vmatpush1.msra.mxu0 0.0
    %1376 = vmatprep.subr.mxu0 0.0
    %1377 = vmatpush1.msra.mxu0 0.0
    %1378 = vmatprep.mubr.f32.mxu0 0.0
    %1379 = vmatmul.mubr.f32.gmra.mrb[0].mxu0 %v1298
    %v1380 = vpop.f32.mrb[0].mxu0
    %v1381 = vadd.f32 %v1297, %v1380
    %v1382 = vpop.f32.mrb[0].mxu0
    %1383 = vmatprep.mubr.f32.mxu0 0.0
    %1384 = vmatmul.mubr.f32.gmra.mrb[0].mxu0 %v1300
    %v1385 = vpop.f32.mrb[0].mxu0
    %v1386 = vadd.f32 %v1297, %v1385
    %v1387 = vpop.f32.mrb[0].mxu0
    %1388 = vmatprep.mubr.f32.mxu0 0.0
    %1389 = vmatmul.mubr.f32.gmra.mrb[0].mxu0 %v1302
    %v1390 = vpop.f32.mrb[0].mxu0
    %v1391 = vadd.f32 %v1297, %v1390
    %v1392 = vpop.f32.mrb[0].mxu0
    %1393 = vmatprep.mubr.f32.mxu0 0.0
    %1394 = vmatmul.mubr.f32.gmra.mrb[0].mxu0 %v1304
    %v1395 = vpop.f32.mrb[0].mxu0
    %v1396 = vadd.f32 %v1297, %v1395
    %v1397 = vpop.f32.mrb[0].mxu0
    %1398 = vmatprep.mubr.f32.mxu0 0.0
    %1399 = vmatmul.mubr.f32.gmra.mrb[0].mxu0 %v1306
    %v1400 = vpop.f32.mrb[0].mxu0
    %v1401 = vadd.f32 %v1297, %v1400
    %v1402 = vpop.f32.mrb[0].mxu0
    %1403 = vmatprep.mubr.f32.mxu0 0.0
    %1404 = vmatmul.mubr.f32.gmra.mrb[0].mxu0 %v1308
    %v1405 = vpop.f32.mrb[0].mxu0
    %v1406 = vadd.f32 %v1297, %v1405
    %v1407 = vpop.f32.mrb[0].mxu0
    %1408 = vmatprep.mubr.f32.mxu0 0.0
    %1409 = vmatmul.mubr.f32.gmra.mrb[0].mxu0 %v1310
    %v1410 = vpop.f32.mrb[0].mxu0
    %v1411 = vadd.f32 %v1297, %v1410
    %v1412 = vpop.f32.mrb[0].mxu0
    %1413 = vmatprep.mubr.f32.mxu0 0.0
    %1414 = vmatmul.mubr.f32.gmra.mrb[0].mxu0 %v1312
    %v1415 = vpop.f32.mrb[0].mxu0
    %v1416 = vadd.f32 %v1297, %v1415
    %v1417 = vpop.f32.mrb[0].mxu0
    %1418 = vdwg.mxu0
    %v1419 = vadd.f32 %v1262, %v1381
    %v1420 = vadd.f32 %v1265, %v1386
    %v1421 = vadd.f32 %v1270, %v1391
    %v1422 = vadd.f32 %v1273, %v1396
    %v1423 = vadd.f32 %v1278, %v1401
    %v1424 = vadd.f32 %v1281, %v1406
    %v1425 = vadd.f32 %v1286, %v1411
    %v1426 = vadd.f32 %v1289, %v1416
    %v1427 = vmax.f32 %v1419, 0.0
    %v1428 = vmax.f32 %v1420, 0.0
    %v1429 = vmax.f32 %v1421, 0.0
    %v1430 = vmax.f32 %v1422, 0.0
    %v1431 = vmax.f32 %v1423, 0.0
    %v1432 = vmax.f32 %v1424, 0.0
    %v1433 = vmax.f32 %v1425, 0.0
    %v1434 = vmax.f32 %v1426, 0.0
    %1436 = vrot.lane.b32.xlu0 %v1428, 32
    %v1437 = vpop.permute.xlu0 %1436
    %1440 = vrot.lane.b32.xlu0 %v1429, 64
    %v1441 = vpop.permute.xlu0 %1440
    %1444 = vrot.lane.b32.xlu0 %v1430, 96
    %v1445 = vpop.permute.xlu0 %1444
    %1448 = vrot.lane.b32.xlu0 %v1432, 32
    %v1449 = vpop.permute.xlu0 %1448
    %1452 = vrot.lane.b32.xlu0 %v1433, 64
    %v1453 = vpop.permute.xlu0 %1452
    %1456 = vrot.lane.b32.xlu0 %v1434, 96
    %v1457 = vpop.permute.xlu0 %1456
    %v1459 = vsel %vm770, %v1427, %v1437
    %v1460 = vsel %vm469, %v1459, %v1441
    %v1461 = vsel %vm1214, %v1460, %v1445
    %v1462 = vsel %vm770, %v1431, %v1449
    %v1463 = vsel %vm469, %v1462, %v1453
    %v1464 = vsel %vm1214, %v1463, %v1457
    %v1465 = vld [vmem:[%s8] sm:$0xff]
    %v1466 = vld [vmem:[%s8 + $0x8] sm:$0xff]
    %v1467 = vld [vmem:[%s8 + $0x10] sm:$0xff]
    %v1468 = vld [vmem:[%s8 + $0x18] sm:$0xff]
    %v1469 = vld [vmem:[%s8 + $0x20] sm:$0xff]
    %v1470 = vld [vmem:[%s8 + $0x28] sm:$0xff]
    %v1471 = vld [vmem:[%s8 + $0x30] sm:$0xff]
    %v1472 = vld [vmem:[%s8 + $0x38] sm:$0xff]
    %v1473 = vld [vmem:[%s8 + $0x40] sm:$0xff]
    %v1474 = vld [vmem:[%s8 + $0x48] sm:$0xff]
    %v1475 = vld [vmem:[%s8 + $0x50] sm:$0xff]
    %v1476 = vld [vmem:[%s8 + $0x58] sm:$0xff]
    %v1477 = vld [vmem:[%s8 + $0x60] sm:$0xff]
    %v1478 = vld [vmem:[%s8 + $0x68] sm:$0xff]
    %v1479 = vld [vmem:[%s8 + $0x70] sm:$0xff]
    %v1480 = vld [vmem:[%s8 + $0x78] sm:$0xff]
    %v1481 = vld [vmem:[%s8 + $0x80] sm:$0xff]
    %v1482 = vld [vmem:[%s8 + $0x88] sm:$0xff]
    %v1483 = vld [vmem:[%s8 + $0x90] sm:$0xff]
    %v1484 = vld [vmem:[%s8 + $0x98] sm:$0xff]
    %v1485 = vld [vmem:[%s8 + $0xa0] sm:$0xff]
    %v1486 = vld [vmem:[%s8 + $0xa8] sm:$0xff]
    %v1487 = vld [vmem:[%s8 + $0xb0] sm:$0xff]
    %v1488 = vld [vmem:[%s8 + $0xb8] sm:$0xff]
    %v1489 = vld [vmem:[%s8 + $0xc0] sm:$0xff]
    %v1490 = vld [vmem:[%s8 + $0xc8] sm:$0xff]
    %v1491 = vld [vmem:[%s8 + $0xd0] sm:$0xff]
    %v1492 = vld [vmem:[%s8 + $0xd8] sm:$0xff]
    %v1493 = vld [vmem:[%s8 + $0xe0] sm:$0xff]
    %v1494 = vld [vmem:[%s8 + $0xe8] sm:$0xff]
    %v1495 = vld [vmem:[%s8 + $0xf0] sm:$0xff]
    %v1496 = vld [vmem:[%s8 + $0xf8] sm:$0xff]
    %v1497 = vlaneseq
    %v1498 = vshrl.u32 %v1497, 7
    %v1499 = vsub.s32 7, %v1498
    %v1500 = vrot.slane %v81, %v1499
    %1501 = vmatprep.subr.mxu0 0.0
    %1502 = vmatpush1.msra.mxu0 %v1465
    %1503 = vmatprep.subr.mxu0 0.0
    %1504 = vmatpush1.msra.mxu0 %v1466
    %1505 = vmatprep.subr.mxu0 0.0
    %1506 = vmatpush1.msra.mxu0 %v1467
    %1507 = vmatprep.subr.mxu0 0.0
    %1508 = vmatpush1.msra.mxu0 %v1468
    %1509 = vmatprep.subr.mxu0 0.0
    %1510 = vmatpush1.msra.mxu0 %v1469
    %1511 = vmatprep.subr.mxu0 0.0
    %1512 = vmatpush1.msra.mxu0 %v1470
    %1513 = vmatprep.subr.mxu0 0.0
    %1514 = vmatpush1.msra.mxu0 %v1471
    %1515 = vmatprep.subr.mxu0 0.0
    %1516 = vmatpush1.msra.mxu0 %v1472
    %1517 = vmatprep.subr.mxu0 0.0
    %1518 = vmatpush1.msra.mxu0 %v1473
    %1519 = vmatprep.subr.mxu0 0.0
    %1520 = vmatpush1.msra.mxu0 %v1474
    %1521 = vmatprep.subr.mxu0 0.0
    %1522 = vmatpush1.msra.mxu0 %v1475
    %1523 = vmatprep.subr.mxu0 0.0
    %1524 = vmatpush1.msra.mxu0 %v1476
    %1525 = vmatprep.subr.mxu0 0.0
    %1526 = vmatpush1.msra.mxu0 %v1477
    %1527 = vmatprep.subr.mxu0 0.0
    %1528 = vmatpush1.msra.mxu0 %v1478
    %1529 = vmatprep.subr.mxu0 0.0
    %1530 = vmatpush1.msra.mxu0 %v1479
    %1531 = vmatprep.subr.mxu0 0.0
    %1532 = vmatpush1.msra.mxu0 %v1480
    %1533 = vmatprep.subr.mxu0 0.0
    %1534 = vmatpush1.msra.mxu0 %v1481
    %1535 = vmatprep.subr.mxu0 0.0
    %1536 = vmatpush1.msra.mxu0 %v1482
    %1537 = vmatprep.subr.mxu0 0.0
    %1538 = vmatpush1.msra.mxu0 %v1483
    %1539 = vmatprep.subr.mxu0 0.0
    %1540 = vmatpush1.msra.mxu0 %v1484
    %1541 = vmatprep.subr.mxu0 0.0
    %1542 = vmatpush1.msra.mxu0 %v1485
    %1543 = vmatprep.subr.mxu0 0.0
    %1544 = vmatpush1.msra.mxu0 %v1486
    %1545 = vmatprep.subr.mxu0 0.0
    %1546 = vmatpush1.msra.mxu0 %v1487
    %1547 = vmatprep.subr.mxu0 0.0
    %1548 = vmatpush1.msra.mxu0 %v1488
    %1549 = vmatprep.subr.mxu0 0.0
    %1550 = vmatpush1.msra.mxu0 %v1489
    %1551 = vmatprep.subr.mxu0 0.0
    %1552 = vmatpush1.msra.mxu0 %v1490
    %1553 = vmatprep.subr.mxu0 0.0
    %1554 = vmatpush1.msra.mxu0 %v1491
    %1555 = vmatprep.subr.mxu0 0.0
    %1556 = vmatpush1.msra.mxu0 %v1492
    %1557 = vmatprep.subr.mxu0 0.0
    %1558 = vmatpush1.msra.mxu0 %v1493
    %1559 = vmatprep.subr.mxu0 0.0
    %1560 = vmatpush1.msra.mxu0 %v1494
    %1561 = vmatprep.subr.mxu0 0.0
    %1562 = vmatpush1.msra.mxu0 %v1495
    %1563 = vmatprep.subr.mxu0 0.0
    %1564 = vmatpush1.msra.mxu0 %v1496
    %1565 = vmatprep.mubr.f32.mxu0 %v1464
    %1566 = vmatmul.mubr.f32.gmra.mrb[0].mxu0 %v1461
    %v1567 = vpop.f32.mrb[0].mxu0
    %v1568 = vadd.f32 %v1500, %v1567
    %v1569 = vpop.f32.mrb[0].mxu0
    %1570 = vdwg.mxu0
    %v1571 = vmax.f32 %v1568, 0.0
    %v1572 = vld [vmem:[%s9] sm:$0xff]
    %v1573 = vld [vmem:[%s9 + $0x8] sm:$0xff]
    %v1574 = vld [vmem:[%s9 + $0x10] sm:$0xff]
    %v1575 = vld [vmem:[%s9 + $0x18] sm:$0xff]
    %v1576 = vld [vmem:[%s9 + $0x20] sm:$0xff]
    %v1577 = vld [vmem:[%s9 + $0x28] sm:$0xff]
    %v1578 = vld [vmem:[%s9 + $0x30] sm:$0xff]
    %v1579 = vld [vmem:[%s9 + $0x38] sm:$0xff]
    %v1580 = vld [vmem:[%s9 + $0x40] sm:$0xff]
    %v1581 = vld [vmem:[%s9 + $0x48] sm:$0xff]
    %v1582 = vld [vmem:[%s9 + $0x50] sm:$0xff]
    %v1583 = vld [vmem:[%s9 + $0x58] sm:$0xff]
    %v1584 = vld [vmem:[%s9 + $0x60] sm:$0xff]
    %v1585 = vld [vmem:[%s9 + $0x68] sm:$0xff]
    %v1586 = vld [vmem:[%s9 + $0x70] sm:$0xff]
    %v1587 = vld [vmem:[%s9 + $0x78] sm:$0xff]
    %v1588 = vlaneseq
    %v1589 = vshrl.u32 %v1588, 7
    %v1590 = vsub.s32 0, %v1589
    %v1591 = vrot.slane %v82, %v1590
    %1592 = vmatprep.subr.mxu0 0.0
    %1593 = vmatpush1.msra.mxu0 %v1572
    %1594 = vmatprep.subr.mxu0 0.0
    %1595 = vmatpush1.msra.mxu0 %v1573
    %1596 = vmatprep.subr.mxu0 0.0
    %1597 = vmatpush1.msra.mxu0 %v1574
    %1598 = vmatprep.subr.mxu0 0.0
    %1599 = vmatpush1.msra.mxu0 %v1575
    %1600 = vmatprep.subr.mxu0 0.0
    %1601 = vmatpush1.msra.mxu0 %v1576
    %1602 = vmatprep.subr.mxu0 0.0
    %1603 = vmatpush1.msra.mxu0 %v1577
    %1604 = vmatprep.subr.mxu0 0.0
    %1605 = vmatpush1.msra.mxu0 %v1578
    %1606 = vmatprep.subr.mxu0 0.0
    %1607 = vmatpush1.msra.mxu0 %v1579
    %1608 = vmatprep.subr.mxu0 0.0
    %1609 = vmatpush1.msra.mxu0 %v1580
    %1610 = vmatprep.subr.mxu0 0.0
    %1611 = vmatpush1.msra.mxu0 %v1581
    %1612 = vmatprep.subr.mxu0 0.0
    %1613 = vmatpush1.msra.mxu0 %v1582
    %1614 = vmatprep.subr.mxu0 0.0
    %1615 = vmatpush1.msra.mxu0 %v1583
    %1616 = vmatprep.subr.mxu0 0.0
    %1617 = vmatpush1.msra.mxu0 %v1584
    %1618 = vmatprep.subr.mxu0 0.0
    %1619 = vmatpush1.msra.mxu0 %v1585
    %1620 = vmatprep.subr.mxu0 0.0
    %1621 = vmatpush1.msra.mxu0 %v1586
    %1622 = vmatprep.subr.mxu0 0.0
    %1623 = vmatpush1.msra.mxu0 %v1587
    %1624 = vmatprep.subr.mxu0 0.0
    %1625 = vmatpush1.msra.mxu0 0.0
    %1626 = vmatprep.subr.mxu0 0.0
    %1627 = vmatpush1.msra.mxu0 0.0
    %1628 = vmatprep.subr.mxu0 0.0
    %1629 = vmatpush1.msra.mxu0 0.0
    %1630 = vmatprep.subr.mxu0 0.0
    %1631 = vmatpush1.msra.mxu0 0.0
    %1632 = vmatprep.subr.mxu0 0.0
    %1633 = vmatpush1.msra.mxu0 0.0
    %1634 = vmatprep.subr.mxu0 0.0
    %1635 = vmatpush1.msra.mxu0 0.0
    %1636 = vmatprep.subr.mxu0 0.0
    %1637 = vmatpush1.msra.mxu0 0.0
    %1638 = vmatprep.subr.mxu0 0.0
    %1639 = vmatpush1.msra.mxu0 0.0
    %1640 = vmatprep.subr.mxu0 0.0
    %1641 = vmatpush1.msra.mxu0 0.0
    %1642 = vmatprep.subr.mxu0 0.0
    %1643 = vmatpush1.msra.mxu0 0.0
    %1644 = vmatprep.subr.mxu0 0.0
    %1645 = vmatpush1.msra.mxu0 0.0
    %1646 = vmatprep.subr.mxu0 0.0
    %1647 = vmatpush1.msra.mxu0 0.0
    %1648 = vmatprep.subr.mxu0 0.0
    %1649 = vmatpush1.msra.mxu0 0.0
    %1650 = vmatprep.subr.mxu0 0.0
    %1651 = vmatpush1.msra.mxu0 0.0
    %1652 = vmatprep.subr.mxu0 0.0
    %1653 = vmatpush1.msra.mxu0 0.0
    %1654 = vmatprep.subr.mxu0 0.0
    %1655 = vmatpush1.msra.mxu0 0.0
    %1656 = vmatprep.mubr.f32.mxu0 0.0
    %1657 = vmatmul.mubr.f32.gmra.mrb[0].mxu0 %v1571
    %v1658 = vpop.f32.mrb[0].mxu0
    %v1659 = vadd.f32 %v1591, %v1658
    %v1660 = vpop.f32.mrb[0].mxu0
    %1661 = vdwg.mxu0
    %1662 = vmax.xlane.f32.xlu0 %v1659
    %v1663 = vpop.xlane.xlu0 %1662
    %v1664 = vsub.f32 %v1659, %v1663
    %v1665 = vmul.f32 %v1664, 1.442695
    %v1666 = vpow.pop %v1665
    %1667 = vadd.xlane.f32.xlu0 %v1666
    %v1668 = vpop.xlane.xlu0 %1667
    %v1669 = vrcp.pop %v1668
    %v1670 = vmul.f32 %v1666, %v1669
    %1671 = vst [vmem:[#allocation8] sm:$0xff] %v1670
    // Predicated region
    $region58: #{resnet_forward.1} parent=1 // pred_check
      _
    $region59: #{resnet_forward.1} parent=1 // pred_check_branch
      %1673 = sbr.rel (0) target = $region61
    $region60: #{resnet_forward.1} parent=1 // pred_region
      %s1675 = ssub.s32 128, 128
      %1676 = vsyncadd [#allocation4], %s1675
      %s1678 = sshll.u32 [#allocation8], 4
      %s1679 = int_to_ptr.vmem [resolvable:$true] %s1678
      %1681 = dma.vmem_to_hbm [thread:$0]  %s1679, 128, %s11, [#allocation4]
    $region61: #{resnet_forward.1} parent=1 // pred_fallthru
      _
    // Predicated region
    $region62: #{resnet_forward.1} parent=1 // pred_check
      _
    $region63: #{resnet_forward.1} parent=1 // pred_check_branch
      %1683 = sbr.rel (0) target = $region65
    $region64: #{resnet_forward.1} parent=1 // pred_region
      %1684 = dma.done [#allocation4], 128
    $region65: #{resnet_forward.1} parent=1 // pred_fallthru
      _
    %1685 = vsyncpa [#allocation3], 1
    %1686 = vsyncpa [#allocation6], 1
    %1687 = vsyncpa [#allocation4], 1

</llo_original>
